<compile_context>
chip_gen: v6e
topology: v6e:2x2x1
jax: 0.10.0
libtpu: 0.0.40
codegen_flags: <defaults>
</compile_context>

<pallas_src>
import functools

import numpy as np
import jax
import jax.numpy as jnp
from jax.experimental import pallas as pl
from jax.experimental.pallas import tpu as pltpu

K = 10  # number of GPR propagation hops (GPR_prop default)


def gpr_prop_kernel(temp_ref, z0_ref, a_ref, out_ref, z_scr, hid_ref, *,
                    a_resident):
    # temp_ref: SMEM (K+1,) f32 coefficients (scalar prefetch)
    # z0_ref  : VMEM (np_, cp) bf16, resident (constant block index)
    # a_ref   : VMEM bf16 A_prop; (np_, np_) resident or (tm, np_) streamed tile
    # out_ref : VMEM (tm, cp) f32 output tile (written only on the last hop)
    # z_scr   : VMEM (2, np_, cp) bf16 ping-pong z buffers
    # hid_ref : VMEM (np_, cp) f32 hidden accumulator
    k = pl.program_id(0)
    i = pl.program_id(1)
    n_hops = pl.num_programs(0)
    tm = out_ref.shape[0]
    row0 = pl.multiple_of(i * tm, tm)

    @pl.when(k == 0)
    def _init():
        # Seed the ping-pong buffer with z0 once (bf16 VMEM->VMEM copy, no
        # cast) and the hidden accumulator for this row tile with temp[0]*z0.
        @pl.when(i == 0)
        def _seed():
            z_scr[0] = z0_ref[...]

        hid_ref[pl.ds(row0, tm), :] = (
            temp_ref[0] * z0_ref[pl.ds(row0, tm), :].astype(jnp.float32))

    read_slot = k % 2          # k == 0 reads slot 0 (seeded with z0)
    write_slot = 1 - read_slot

    if a_resident:
        a_rows = a_ref[pl.ds(row0, tm), :]      # slice VMEM-resident A
    else:
        a_rows = a_ref[...]                     # streamed row tile

    # One hop for this row tile: z_new = A[rows] @ z^k  (bf16 in, f32 acc).
    z_new = jnp.dot(a_rows, z_scr[read_slot],
                    preferred_element_type=jnp.float32)          # (tm, cp) f32
    z_scr[write_slot, pl.ds(row0, tm), :] = z_new.astype(z_scr.dtype)

    hid_new = hid_ref[pl.ds(row0, tm), :] + temp_ref[k + 1] * z_new
    hid_ref[pl.ds(row0, tm), :] = hid_new

    # Only the last hop's hidden is the result -> single HBM writeback / tile.
    @pl.when(k == n_hops - 1)
    def _final():
        out_ref[...] = hid_new


def _vmem_budget_bytes():
    cap = 64 * 1024 * 1024            # conservative default (v7x per-core VMEM)
    try:
        cap = int(pltpu.get_tpu_info().vmem_capacity_bytes)
    except Exception:
        pass
    # ~51 MiB usable on v7x (64 MiB physical), ~102 MiB on v5e/v6e (128 MiB).
    return int(cap * 0.8)


def _spec(block_shape, index_map, *, single_buffer):
    # Single-buffer residents (constant block index) so they aren't allocated
    # twice; fall back to a plain BlockSpec if Buffered isn't available.
    if single_buffer and hasattr(pl, "Buffered"):
        return pl.BlockSpec(block_shape, index_map,
                            pipeline_mode=pl.Buffered(1))
    return pl.BlockSpec(block_shape, index_map)


def _run_prop(temp, z0_bf, a_bf, *, np_, cp, tm, a_resident, single_buffer,
              vmem_limit):
    n_tiles = np_ // tm
    last = K - 1

    if a_resident:
        a_spec = _spec((np_, np_), lambda k, i, temp: (0, 0),
                       single_buffer=single_buffer)
        a_bytes = np_ * np_ * 2                       # A fetched once
    else:
        a_spec = pl.BlockSpec((tm, np_), lambda k, i, temp: (i, 0))
        a_bytes = K * np_ * np_ * 2                   # A re-streamed every hop

    z0_spec = _spec((np_, cp), lambda k, i, temp: (0, 0),
                    single_buffer=single_buffer)

    # Collapse the out block index to (0, 0) for k < K-1 so only the last
    # hop's tiles are ever written back to HBM (one writeback per row tile).
    out_spec = pl.BlockSpec(
        (tm, cp), lambda k, i, temp: (jnp.where(k == last, i, 0), 0))

    cost = pl.CostEstimate(
        flops=2 * K * np_ * np_ * cp,
        transcendentals=0,
        bytes_accessed=a_bytes + np_ * cp * 2 + np_ * cp * 4 + (K + 1) * 4,
    )

    kernel = functools.partial(gpr_prop_kernel, a_resident=a_resident)
    out = pl.pallas_call(
        kernel,
        out_shape=jax.ShapeDtypeStruct((np_, cp), jnp.float32),
        grid_spec=pltpu.PrefetchScalarGridSpec(
            num_scalar_prefetch=1,
            grid=(K, n_tiles),
            in_specs=[z0_spec, a_spec],
            out_specs=out_spec,
            scratch_shapes=[
                pltpu.VMEM((2, np_, cp), jnp.bfloat16),   # ping-pong z buffers
                pltpu.VMEM((np_, cp), jnp.float32),       # hidden accumulator
            ],
        ),
        compiler_params=pltpu.CompilerParams(
            # k carries the hop-to-hop dependency; the row-tile axis shares the
            # z/hidden VMEM scratch, so both axes must stay "arbitrary".
            # TODO(synk): a v7x 2-TensorCore split needs an explicit per-hop
            #             z exchange (VMEM_SHARED + semaphores).
            dimension_semantics=("arbitrary", "arbitrary"),
            vmem_limit_bytes=vmem_limit,
        ),
        cost_estimate=cost,
    )(temp, z0_bf, a_bf)
    return jax.block_until_ready(out)


def gprgnn_forward(temp, x, w1, b1, w2, b2, a_prop, *, tm=256):
    # tm=256 feeds the 256-wide MXU on v6e/v7x; 128 is the native width on v5e
    # but 256 still helps DMA size / per-step overhead in the streaming path.
    N = x.shape[0]
    C = w2.shape[1]

    # --- 2-layer MLP in plain XLA (negligible FLOPs).
    # TODO(synk): F.dropout is stochastic; treated as identity (eval mode).
    h = jnp.maximum(x @ w1 + b1, 0.0)
    z0 = h @ w2 + b2                                        # (N, C) f32

    # --- pad: channel dim to a full 128-lane tile, rows to a multiple of tm.
    cp = max(128, ((C + 127) // 128) * 128)
    np_ = ((N + tm - 1) // tm) * tm
    z0_bf = (jnp.zeros((np_, cp), jnp.float32).at[:N, :C].set(z0)
             .astype(jnp.bfloat16))
    a_bf = (jnp.zeros((np_, np_), jnp.float32).at[:N, :N].set(a_prop)
            .astype(jnp.bfloat16))

    # --- per-generation VMEM sizing: choose resident-A vs streamed-A path.
    budget = _vmem_budget_bytes()
    a_buffers = 1 if hasattr(pl, "Buffered") else 2
    fixed = (a_buffers * np_ * cp * 2          # resident bf16 z0
             + 2 * np_ * cp * 2                # ping-pong bf16 z scratch
             + np_ * cp * 4                    # f32 hidden accumulator
             + 2 * tm * cp * 4                 # double-buffered out tiles
             + (4 << 20))                      # compiler scratch headroom
    resident_need = fixed + a_buffers * np_ * np_ * 2
    streaming_need = fixed + 2 * tm * np_ * 2
    a_resident = resident_need <= budget
    need = resident_need if a_resident else streaming_need
    vmem_limit = int(min(budget, max(need + (8 << 20), 32 << 20)))

    kwargs = dict(np_=np_, cp=cp, tm=tm, a_resident=a_resident,
                  vmem_limit=vmem_limit)
    try:
        out = _run_prop(temp, z0_bf, a_bf, single_buffer=True, **kwargs)
    except Exception:
        # Graceful fallback if pipeline_mode=pl.Buffered(1) is unsupported on
        # this JAX version; residents are then (at worst) double-buffered.
        out = _run_prop(temp, z0_bf, a_bf, single_buffer=False, **kwargs)

    return out[:N, :C]


def build_gcn_norm_dense(edge_index, num_nodes):
    """Dense equivalent of PyG gcn_norm (+ self loops, symmetric norm)."""
    row, col = edge_index[0], edge_index[1]
    ew = jnp.ones(row.shape[0], jnp.float32)
    W = jnp.zeros((num_nodes, num_nodes), jnp.float32).at[row, col].add(ew)
    W = W + jnp.eye(num_nodes, dtype=jnp.float32)           # add_self_loops
    deg = W.sum(axis=0)                                     # scatter_add over col
    dinv = jnp.where(deg > 0, 1.0 / jnp.sqrt(deg), 0.0)
    n_hat = dinv[:, None] * W * dinv[None, :]
    # propagate: out[i] = sum_{edges (row=j -> col=i)} norm * x[j]  => A_prop = n_hat^T
    return n_hat.T


if __name__ == "__main__":
    key = jax.random.PRNGKey(0)
    N, F_IN, HID, C_OUT = 256, 32, 16, 8

    k_x, k_e, k_w1, k_b1, k_w2, k_b2, k_t = jax.random.split(key, 7)

    # Node features
    x = jax.random.normal(k_x, (N, F_IN), dtype=jnp.float32)

    # Random undirected edge set (deterministic)
    num_edges = 512
    src = jax.random.randint(k_e, (num_edges,), 0, N)
    dst = jax.random.randint(jax.random.fold_in(k_e, 1), (num_edges,), 0, N)
    edge_index = jnp.stack(
        [jnp.concatenate([src, dst]), jnp.concatenate([dst, src])], axis=0)
    a_prop = build_gcn_norm_dense(edge_index, N)

    # Linear layer params (deterministic, PyTorch-style uniform bounds)
    lim1 = 1.0 / np.sqrt(F_IN)
    w1 = jax.random.uniform(k_w1, (F_IN, HID), jnp.float32, -lim1, lim1)
    b1 = jax.random.uniform(k_b1, (1, HID), jnp.float32, -lim1, lim1)
    lim2 = 1.0 / np.sqrt(HID)
    w2 = jax.random.uniform(k_w2, (HID, C_OUT), jnp.float32, -lim2, lim2)
    b2 = jax.random.uniform(k_b2, (1, C_OUT), jnp.float32, -lim2, lim2)

    # GPR_prop temp coefficients, Init='Random': U(-b, b) normalized by L1 sum
    bound = np.sqrt(3.0 / (K + 1))
    temp = jax.random.uniform(k_t, (K + 1,), jnp.float32, -bound, bound)
    temp = temp / jnp.sum(jnp.abs(temp))

    out = gprgnn_forward(temp, x, w1, b1, w2, b2, a_prop)
    out = jax.block_until_ready(out)
    assert out.shape == (N, C_OUT)

    # Reference 1: same numerical path as the kernel (bf16 A / z, f32 acc).
    h_ref = jnp.maximum(x @ w1 + b1, 0.0)
    z_f32 = h_ref @ w2 + b2
    a16 = a_prop.astype(jnp.bfloat16)
    z16 = z_f32.astype(jnp.bfloat16)
    hid_bf = temp[0] * z16.astype(jnp.float32)
    for k in range(K):
        z32 = jnp.dot(a16, z16, preferred_element_type=jnp.float32)
        hid_bf = hid_bf + temp[k + 1] * z32
        z16 = z32.astype(jnp.bfloat16)
    assert jnp.allclose(out, hid_bf, atol=5e-3, rtol=5e-3), (
        float(jnp.max(jnp.abs(out - hid_bf))))

    # Reference 2: full-f32 hops (module semantics); loose tol for bf16 hops.
    hid_f32 = temp[0] * z_f32
    zz = z_f32
    for k in range(K):
        zz = a_prop @ zz
        hid_f32 = hid_f32 + temp[k + 1] * zz
    assert jnp.allclose(out, hid_f32, atol=5e-2, rtol=5e-2), (
        float(jnp.max(jnp.abs(out - hid_f32))))

    print("KERNEL_OK")
</pallas_src>

<mosaic_0001>
module attributes {stable_mosaic.version = 11 : i64} {
  func.func @gpr_prop_kernel(%arg0: i32, %arg1: i32, %arg2: memref<11xf32, #tpu.memory_space<smem>>, %arg3: memref<256x128xbf16, #tpu.memory_space<vmem>>, %arg4: memref<256x256xbf16, #tpu.memory_space<vmem>>, %arg5: memref<256x128xf32, #tpu.memory_space<vmem>>, %arg6: memref<2x256x128xbf16, #tpu.memory_space<vmem>>, %arg7: memref<256x128xf32, #tpu.memory_space<vmem>>) attributes {dimension_semantics = [#tpu.dimension_semantics<arbitrary>, #tpu.dimension_semantics<arbitrary>], iteration_bounds = array<i64: 10, 1>, scalar_prefetch = 1 : i64, scratch_operands = 2 : i64, tpu.core_type = #tpu.core_type<tc>, window_params = [{pipeline_mode = #tpu.pipeline_mode<synchronous>, transform_indices = @transform_0, window_bounds = array<i64: 256, 128>}, {pipeline_mode = #tpu.pipeline_mode<synchronous>, transform_indices = @transform_1, window_bounds = array<i64: 256, 256>}, {transform_indices = @transform_2, window_bounds = array<i64: 256, 128>}]} {
    %c256_i32 = arith.constant 256 : i32
    %0 = arith.muli %arg1, %c256_i32 : i32
    %1 = tpu.assume_multiple %0, 256 : i32
    %c0_i32 = arith.constant 0 : i32
    %2 = arith.cmpi eq, %arg0, %c0_i32 : i32
    %3 = arith.extui %2 : i1 to i32
    %c0_i32_0 = arith.constant 0 : i32
    %4 = arith.cmpi ne, %3, %c0_i32_0 : i32
    scf.if %4 {
      %c0_i32_13 = arith.constant 0 : i32
      %41 = arith.cmpi eq, %arg1, %c0_i32_13 : i32
      %42 = arith.extui %41 : i1 to i32
      %c0_i32_14 = arith.constant 0 : i32
      %43 = arith.cmpi ne, %42, %c0_i32_14 : i32
      scf.if %43 {
        %c0_18 = arith.constant 0 : index
        %c0_19 = arith.constant 0 : index
        %52 = vector.load %arg3[%c0_18, %c0_19] : memref<256x128xbf16, #tpu.memory_space<vmem>>, vector<256x128xbf16>
        %c0_20 = arith.constant 0 : index
        %c0_21 = arith.constant 0 : index
        %c0_22 = arith.constant 0 : index
        %53 = vector.load %arg6[%c0_20, %c0_21, %c0_22] : memref<2x256x128xbf16, #tpu.memory_space<vmem>>, vector<1x256x128xbf16>
        %54 = vector.shape_cast %53 : vector<1x256x128xbf16> to vector<256x128xbf16>
        %55 = vector.shape_cast %52 : vector<256x128xbf16> to vector<1x256x128xbf16>
        tpu.vector_store %arg6[%c0_20, %c0_21, %c0_22], %55 {strides = array<i32>} : memref<2x256x128xbf16, #tpu.memory_space<vmem>>, vector<1x256x128xbf16>,
      } else {
      }
      %c0_15 = arith.constant 0 : index
      %44 = memref.load %arg2[%c0_15] : memref<11xf32, #tpu.memory_space<smem>>
      %45 = arith.index_cast %1 : i32 to index
      %c0_16 = arith.constant 0 : index
      %46 = vector.load %arg3[%45, %c0_16] : memref<256x128xbf16, #tpu.memory_space<vmem>>, vector<256x128xbf16>
      %47 = arith.extf %46 : vector<256x128xbf16> to vector<256x128xf32>
      %48 = vector.broadcast %44 : f32 to vector<256x128xf32>
      %49 = arith.mulf %48, %47 : vector<256x128xf32>
      %50 = arith.index_cast %1 : i32 to index
      %c0_17 = arith.constant 0 : index
      %51 = vector.load %arg7[%50, %c0_17] : memref<256x128xf32, #tpu.memory_space<vmem>>, vector<256x128xf32>
      tpu.vector_store %arg7[%50, %c0_17], %49 {strides = array<i32>} : memref<256x128xf32, #tpu.memory_space<vmem>>, vector<256x128xf32>,
    } else {
    }
    %c2_i32 = arith.constant 2 : i32
    %c0_i32_1 = arith.constant 0 : i32
    %5 = arith.cmpi eq, %c2_i32, %c0_i32_1 : i32
    %c1_i32 = arith.constant 1 : i32
    %6 = arith.select %5, %c1_i32, %c2_i32 : i32
    %7 = arith.remsi %arg0, %6 : i32
    %c0_i32_2 = arith.constant 0 : i32
    %8 = arith.cmpi ne, %7, %c0_i32_2 : i32
    %c0_i32_3 = arith.constant 0 : i32
    %9 = arith.cmpi slt, %7, %c0_i32_3 : i32
    %c0_i32_4 = arith.constant 0 : i32
    %10 = arith.cmpi slt, %6, %c0_i32_4 : i32
    %11 = arith.xori %9, %10 : i1
    %12 = arith.andi %11, %8 : i1
    %13 = arith.addi %7, %6 : i32
    %14 = arith.select %12, %13, %7 : i32
    %c1_i32_5 = arith.constant 1 : i32
    %15 = arith.subi %c1_i32_5, %14 : i32
    %16 = arith.index_cast %1 : i32 to index
    %c0 = arith.constant 0 : index
    %17 = vector.load %arg4[%16, %c0] : memref<256x256xbf16, #tpu.memory_space<vmem>>, vector<256x256xbf16>
    %18 = arith.index_cast %14 : i32 to index
    %c0_6 = arith.constant 0 : index
    %c0_7 = arith.constant 0 : index
    %19 = vector.load %arg6[%18, %c0_6, %c0_7] : memref<2x256x128xbf16, #tpu.memory_space<vmem>>, vector<1x256x128xbf16>
    %20 = vector.shape_cast %19 : vector<1x256x128xbf16> to vector<256x128xbf16>
    %cst = arith.constant dense<0.000000e+00> : vector<256x128xf32>
    %21 = tpu.matmul %17, %20, %cst {dimension_numbers = #tpu.dot_dimension_numbers<[1], [0], [0], [1], [0, 0, 1, 1], [], []>} : vector<256x256xbf16>, vector<256x128xbf16>, vector<256x128xf32> -> vector<256x128xf32>
    %22 = arith.truncf %21 : vector<256x128xf32> to vector<256x128xbf16>
    %23 = arith.index_cast %15 : i32 to index
    %24 = arith.index_cast %1 : i32 to index
    %c0_8 = arith.constant 0 : index
    %25 = vector.load %arg6[%23, %24, %c0_8] : memref<2x256x128xbf16, #tpu.memory_space<vmem>>, vector<1x256x128xbf16>
    %26 = vector.shape_cast %25 : vector<1x256x128xbf16> to vector<256x128xbf16>
    %27 = vector.shape_cast %22 : vector<256x128xbf16> to vector<1x256x128xbf16>
    tpu.vector_store %arg6[%23, %24, %c0_8], %27 {strides = array<i32>} : memref<2x256x128xbf16, #tpu.memory_space<vmem>>, vector<1x256x128xbf16>,
    %28 = arith.index_cast %1 : i32 to index
    %c0_9 = arith.constant 0 : index
    %29 = vector.load %arg7[%28, %c0_9] : memref<256x128xf32, #tpu.memory_space<vmem>>, vector<256x128xf32>
    %c1_i32_10 = arith.constant 1 : i32
    %30 = arith.addi %arg0, %c1_i32_10 : i32
    %31 = arith.index_cast %30 : i32 to index
    %32 = memref.load %arg2[%31] : memref<11xf32, #tpu.memory_space<smem>>
    %33 = vector.broadcast %32 : f32 to vector<256x128xf32>
    %34 = arith.mulf %33, %21 : vector<256x128xf32>
    %35 = arith.addf %29, %34 : vector<256x128xf32>
    %36 = arith.index_cast %1 : i32 to index
    %c0_11 = arith.constant 0 : index
    %37 = vector.load %arg7[%36, %c0_11] : memref<256x128xf32, #tpu.memory_space<vmem>>, vector<256x128xf32>
    tpu.vector_store %arg7[%36, %c0_11], %35 {strides = array<i32>} : memref<256x128xf32, #tpu.memory_space<vmem>>, vector<256x128xf32>,
    %c9_i32 = arith.constant 9 : i32
    %38 = arith.cmpi eq, %arg0, %c9_i32 : i32
    %39 = arith.extui %38 : i1 to i32
    %c0_i32_12 = arith.constant 0 : i32
    %40 = arith.cmpi ne, %39, %c0_i32_12 : i32
    scf.if %40 {
      %c0_13 = arith.constant 0 : index
      %c0_14 = arith.constant 0 : index
      %41 = vector.load %arg5[%c0_13, %c0_14] : memref<256x128xf32, #tpu.memory_space<vmem>>, vector<256x128xf32>
      tpu.vector_store %arg5[%c0_13, %c0_14], %35 {strides = array<i32>} : memref<256x128xf32, #tpu.memory_space<vmem>>, vector<256x128xf32>,
    } else {
    }
    return
  }
  func.func @transform_0(%arg0: i32, %arg1: i32, %arg2: memref<11xf32, #tpu.memory_space<smem>>) -> (i32, i32) {
    %c0_i32 = arith.constant 0 : i32
    %c0_i32_0 = arith.constant 0 : i32
    %c0_i32_1 = arith.constant 0 : i32
    return %c0_i32, %c0_i32_0 : i32, i32
  }
  func.func @transform_1(%arg0: i32, %arg1: i32, %arg2: memref<11xf32, #tpu.memory_space<smem>>) -> (i32, i32) {
    %c0_i32 = arith.constant 0 : i32
    %c0_i32_0 = arith.constant 0 : i32
    %c0_i32_1 = arith.constant 0 : i32
    return %c0_i32, %c0_i32_0 : i32, i32
  }
  func.func @transform_2(%arg0: i32, %arg1: i32, %arg2: memref<11xf32, #tpu.memory_space<smem>>) -> (i32, i32) {
    %c9_i32 = arith.constant 9 : i32
    %0 = arith.cmpi eq, %arg0, %c9_i32 : i32
    %c0_i32 = arith.constant 0 : i32
    %1 = arith.select %0, %arg1, %c0_i32 : i32
    %c0_i32_0 = arith.constant 0 : i32
    %c0_i32_1 = arith.constant 0 : i32
    return %1, %c0_i32_0 : i32, i32
  }
}

module attributes {stable_mosaic.version = 11 : i64} {
  func.func @gpr_prop_kernel(%arg0: i32, %arg1: i32, %arg2: memref<11xf32, #tpu.memory_space<smem>>, %arg3: memref<256x128xbf16, #tpu.memory_space<vmem>>, %arg4: memref<256x256xbf16, #tpu.memory_space<vmem>>, %arg5: memref<256x128xf32, #tpu.memory_space<vmem>>, %arg6: memref<2x256x128xbf16, #tpu.memory_space<vmem>>, %arg7: memref<256x128xf32, #tpu.memory_space<vmem>>) attributes {dimension_semantics = [#tpu.dimension_semantics<arbitrary>, #tpu.dimension_semantics<arbitrary>], iteration_bounds = array<i64: 10, 1>, scalar_prefetch = 1 : i64, scratch_operands = 2 : i64, tpu.core_type = #tpu.core_type<tc>, window_params = [{pipeline_mode = #tpu.pipeline_mode<synchronous>, transform_indices = @transform_0, window_bounds = array<i64: 256, 128>}, {pipeline_mode = #tpu.pipeline_mode<synchronous>, transform_indices = @transform_1, window_bounds = array<i64: 256, 256>}, {transform_indices = @transform_2, window_bounds = array<i64: 256, 128>}]} {
    %c256_i32 = arith.constant 256 : i32
    %0 = arith.muli %arg1, %c256_i32 : i32
    %1 = tpu.assume_multiple %0, 256 : i32
    %c0_i32 = arith.constant 0 : i32
    %2 = arith.cmpi eq, %arg0, %c0_i32 : i32
    %3 = arith.extui %2 : i1 to i32
    %c0_i32_0 = arith.constant 0 : i32
    %4 = arith.cmpi ne, %3, %c0_i32_0 : i32
    scf.if %4 {
      %c0_i32_13 = arith.constant 0 : i32
      %41 = arith.cmpi eq, %arg1, %c0_i32_13 : i32
      %42 = arith.extui %41 : i1 to i32
      %c0_i32_14 = arith.constant 0 : i32
      %43 = arith.cmpi ne, %42, %c0_i32_14 : i32
      scf.if %43 {
        %c0_18 = arith.constant 0 : index
        %c0_19 = arith.constant 0 : index
        %52 = vector.load %arg3[%c0_18, %c0_19] : memref<256x128xbf16, #tpu.memory_space<vmem>>, vector<256x128xbf16>
        %c0_20 = arith.constant 0 : index
        %c0_21 = arith.constant 0 : index
        %c0_22 = arith.constant 0 : index
        %53 = vector.load %arg6[%c0_20, %c0_21, %c0_22] : memref<2x256x128xbf16, #tpu.memory_space<vmem>>, vector<1x256x128xbf16>
        %54 = vector.shape_cast %53 : vector<1x256x128xbf16> to vector<256x128xbf16>
        %55 = vector.shape_cast %52 : vector<256x128xbf16> to vector<1x256x128xbf16>
        tpu.vector_store %arg6[%c0_20, %c0_21, %c0_22], %55 {strides = array<i32>} : memref<2x256x128xbf16, #tpu.memory_space<vmem>>, vector<1x256x128xbf16>,
      } else {
      }
      %c0_15 = arith.constant 0 : index
      %44 = memref.load %arg2[%c0_15] : memref<11xf32, #tpu.memory_space<smem>>
      %45 = arith.index_cast %1 : i32 to index
      %c0_16 = arith.constant 0 : index
      %46 = vector.load %arg3[%45, %c0_16] : memref<256x128xbf16, #tpu.memory_space<vmem>>, vector<256x128xbf16>
      %47 = arith.extf %46 : vector<256x128xbf16> to vector<256x128xf32>
      %48 = vector.broadcast %44 : f32 to vector<256x128xf32>
      %49 = arith.mulf %48, %47 : vector<256x128xf32>
      %50 = arith.index_cast %1 : i32 to index
      %c0_17 = arith.constant 0 : index
      %51 = vector.load %arg7[%50, %c0_17] : memref<256x128xf32, #tpu.memory_space<vmem>>, vector<256x128xf32>
      tpu.vector_store %arg7[%50, %c0_17], %49 {strides = array<i32>} : memref<256x128xf32, #tpu.memory_space<vmem>>, vector<256x128xf32>,
    } else {
    }
    %c2_i32 = arith.constant 2 : i32
    %c0_i32_1 = arith.constant 0 : i32
    %5 = arith.cmpi eq, %c2_i32, %c0_i32_1 : i32
    %c1_i32 = arith.constant 1 : i32
    %6 = arith.select %5, %c1_i32, %c2_i32 : i32
    %7 = arith.remsi %arg0, %6 : i32
    %c0_i32_2 = arith.constant 0 : i32
    %8 = arith.cmpi ne, %7, %c0_i32_2 : i32
    %c0_i32_3 = arith.constant 0 : i32
    %9 = arith.cmpi slt, %7, %c0_i32_3 : i32
    %c0_i32_4 = arith.constant 0 : i32
    %10 = arith.cmpi slt, %6, %c0_i32_4 : i32
    %11 = arith.xori %9, %10 : i1
    %12 = arith.andi %11, %8 : i1
    %13 = arith.addi %7, %6 : i32
    %14 = arith.select %12, %13, %7 : i32
    %c1_i32_5 = arith.constant 1 : i32
    %15 = arith.subi %c1_i32_5, %14 : i32
    %16 = arith.index_cast %1 : i32 to index
    %c0 = arith.constant 0 : index
    %17 = vector.load %arg4[%16, %c0] : memref<256x256xbf16, #tpu.memory_space<vmem>>, vector<256x256xbf16>
    %18 = arith.index_cast %14 : i32 to index
    %c0_6 = arith.constant 0 : index
    %c0_7 = arith.constant 0 : index
    %19 = vector.load %arg6[%18, %c0_6, %c0_7] : memref<2x256x128xbf16, #tpu.memory_space<vmem>>, vector<1x256x128xbf16>
    %20 = vector.shape_cast %19 : vector<1x256x128xbf16> to vector<256x128xbf16>
    %cst = arith.constant dense<0.000000e+00> : vector<256x128xf32>
    %21 = tpu.matmul %17, %20, %cst {dimension_numbers = #tpu.dot_dimension_numbers<[1], [0], [0], [1], [0, 0, 1, 1], [], []>} : vector<256x256xbf16>, vector<256x128xbf16>, vector<256x128xf32> -> vector<256x128xf32>
    %22 = arith.truncf %21 : vector<256x128xf32> to vector<256x128xbf16>
    %23 = arith.index_cast %15 : i32 to index
    %24 = arith.index_cast %1 : i32 to index
    %c0_8 = arith.constant 0 : index
    %25 = vector.load %arg6[%23, %24, %c0_8] : memref<2x256x128xbf16, #tpu.memory_space<vmem>>, vector<1x256x128xbf16>
    %26 = vector.shape_cast %25 : vector<1x256x128xbf16> to vector<256x128xbf16>
    %27 = vector.shape_cast %22 : vector<256x128xbf16> to vector<1x256x128xbf16>
    tpu.vector_store %arg6[%23, %24, %c0_8], %27 {strides = array<i32>} : memref<2x256x128xbf16, #tpu.memory_space<vmem>>, vector<1x256x128xbf16>,
    %28 = arith.index_cast %1 : i32 to index
    %c0_9 = arith.constant 0 : index
    %29 = vector.load %arg7[%28, %c0_9] : memref<256x128xf32, #tpu.memory_space<vmem>>, vector<256x128xf32>
    %c1_i32_10 = arith.constant 1 : i32
    %30 = arith.addi %arg0, %c1_i32_10 : i32
    %31 = arith.index_cast %30 : i32 to index
    %32 = memref.load %arg2[%31] : memref<11xf32, #tpu.memory_space<smem>>
    %33 = vector.broadcast %32 : f32 to vector<256x128xf32>
    %34 = arith.mulf %33, %21 : vector<256x128xf32>
    %35 = arith.addf %29, %34 : vector<256x128xf32>
    %36 = arith.index_cast %1 : i32 to index
    %c0_11 = arith.constant 0 : index
    %37 = vector.load %arg7[%36, %c0_11] : memref<256x128xf32, #tpu.memory_space<vmem>>, vector<256x128xf32>
    tpu.vector_store %arg7[%36, %c0_11], %35 {strides = array<i32>} : memref<256x128xf32, #tpu.memory_space<vmem>>, vector<256x128xf32>,
    %c9_i32 = arith.constant 9 : i32
    %38 = arith.cmpi eq, %arg0, %c9_i32 : i32
    %39 = arith.extui %38 : i1 to i32
    %c0_i32_12 = arith.constant 0 : i32
    %40 = arith.cmpi ne, %39, %c0_i32_12 : i32
    scf.if %40 {
      %c0_13 = arith.constant 0 : index
      %c0_14 = arith.constant 0 : index
      %41 = vector.load %arg5[%c0_13, %c0_14] : memref<256x128xf32, #tpu.memory_space<vmem>>, vector<256x128xf32>
      tpu.vector_store %arg5[%c0_13, %c0_14], %35 {strides = array<i32>} : memref<256x128xf32, #tpu.memory_space<vmem>>, vector<256x128xf32>,
    } else {
    }
    return
  }
  func.func @transform_0(%arg0: i32, %arg1: i32, %arg2: memref<11xf32, #tpu.memory_space<smem>>) -> (i32, i32) {
    %c0_i32 = arith.constant 0 : i32
    %c0_i32_0 = arith.constant 0 : i32
    %c0_i32_1 = arith.constant 0 : i32
    return %c0_i32, %c0_i32_0 : i32, i32
  }
  func.func @transform_1(%arg0: i32, %arg1: i32, %arg2: memref<11xf32, #tpu.memory_space<smem>>) -> (i32, i32) {
    %c0_i32 = arith.constant 0 : i32
    %c0_i32_0 = arith.constant 0 : i32
    %c0_i32_1 = arith.constant 0 : i32
    return %c0_i32, %c0_i32_0 : i32, i32
  }
  func.func @transform_2(%arg0: i32, %arg1: i32, %arg2: memref<11xf32, #tpu.memory_space<smem>>) -> (i32, i32) {
    %c9_i32 = arith.constant 9 : i32
    %0 = arith.cmpi eq, %arg0, %c9_i32 : i32
    %c0_i32 = arith.constant 0 : i32
    %1 = arith.select %0, %arg1, %c0_i32 : i32
    %c0_i32_0 = arith.constant 0 : i32
    %c0_i32_1 = arith.constant 0 : i32
    return %1, %c0_i32_0 : i32, i32
  }
}

</mosaic_0001>

<llo_original>
// kernel: tpu_custom_call.1
$region0: #{tpu_custom_call.1}
  #allocation0 [shape = 'u32[]', space=smem, size = 0x4, offset = 0x4, fixed_abs, tag = 'smem constant byte address 0x4 - core index']
  #allocation1 [shape = 'u32[144,128]{1,0:T(1,128)}', space=vmem, size = 0x12000, scoped, tag = 'internal scratch']
  #allocation2 [shape = 'bf16[2,256,128]{2,1,0:T(8,128)(2,1)}', space=vmem, size = 0x20000, scoped, tag = 'scratch operand']
  #allocation3 [shape = 'f32[256,128]{1,0:T(8,128)}', space=vmem, size = 0x20000, scoped, tag = 'scratch operand']
  #allocation4 [shape = 's32[1]{0}', space=sflag, size = 0x4, scoped, tag = 'scoped memory for tpu_custom_call.1']
  #allocation5 [shape = 'u8[512]{0}', space=smem, size = 0x200, scoped, tag = 'prefetched SMEM operand 0']
  %s0 = inlined_call_operand.hbm [shape: f32[11], index: 0, kind: input, shape index: {}]
  %s1 = inlined_call_operand.hbm [shape: bf16[256,128], index: 1, kind: input, shape index: {}]
  %s2 = inlined_call_operand.hbm [shape: bf16[256,256], index: 2, kind: input, shape index: {}]
  %s3 = inlined_call_operand.hbm [shape: f32[256,128], index: 3, kind: output, shape index: {}]
  %s4 = sld [smem:[#allocation0]]
  $region61: #{tpu_custom_call.1} parent=0
    _
  %s6 = ssub.s32 1, %s4
  %s7 = scalar_select 0, %s6, %s4
  %9 = dma.hbm_to_smem %s0, 16, [#allocation5], [#allocation4]
  %10 = dma.done [#allocation4], 16
  %11 = sfence
  $region1: #{tpu_custom_call.1} parent=0
    #allocation6 [shape = 'u8[65536]{0}', space=vmem, size = 0x10000, scoped, tag = 'input window, operand 1, single buffered']
    #allocation7 [shape = 's32[2]{0}', space=sflag, size = 0x8, scoped, tag = 'scoped memory for tpu_custom_call.1']
    #allocation8 [shape = 's32[2]{0}', space=sflag, size = 0x8, scoped, tag = 'scoped memory for tpu_custom_call.1']
    #allocation9 [shape = 'u8[131072]{0}', space=vmem, size = 0x20000, scoped, tag = 'input window, operand 2, single buffered']
    #allocation10 [shape = 's32[1]{0}', space=sflag, size = 0x4, scoped, tag = 'scoped memory for tpu_custom_call.1']
    #allocation11 [shape = 'u8[262144]{0}', space=vmem, size = 0x40000, scoped, tag = 'output window, operand 0']
    %12 = vsyncpa [#allocation7], 0
    %13 = vsyncpa [#allocation10], 0
    %14 = vsyncpa [#allocation8], 0
    %s15 = scalar_lea.sflag [#allocation8], 1
    %16 = vsyncpa %s15, 0
    loop: start=0, step=1, limit=12
    $region2: #{tpu_custom_call.1} parent=1 // loop_pre_header
      _
    $region3: #{tpu_custom_call.1} parent=1 // loop_header
      %s18 = sphi 0, %s22
      %p19 = scmp.ge.s32.totalorder %s18, 12
      %s25 = sphi 0, %s37
      %s26 = sphi 0, %s33
      %s27 = sphi 0, %s25
      %s28 = sphi 0, %s26
      %s29 = sphi 0, %s27
      %s30 = sphi 0, %s28
      %s38 = sphi 0, %s38
      %s40 = sphi 0, %s38
      %s41 = sphi 0, %s40
      %s55 = sphi 0, %s41
      %s59 = sphi 0, %s59
      %s61 = sphi 0, %s59
      %s62 = sphi 0, %s61
      %s76 = sphi 0, %s62
      %s86 = sphi 0, %s88
      %s89 = sphi 0, %s86
      %s90 = sphi 0, %s89
      %s106 = sphi 0, %s90
    $region4: #{tpu_custom_call.1} parent=1 // loop_header_branch
      %21 = sbr.rel (%p19) target = $region8
    $region5: #{tpu_custom_call.1} parent=1 // loop_body
      %s23 = ssub.s32 %s18, 1
      %s24 = ssub.s32 %s18, 2
      %s31 = sadd.s32 1, %s26
      %p32 = scmp.ge.s32.totalorder %s31, 1
      %s33 = scalar_select %p32, 0, %s31
      %s34 = sadd.s32 1, %s25
      %s35 = scalar_select %p32, %s34, %s25
      %p36 = scmp.ge.s32.totalorder %s35, 10
      %s37 = scalar_select %p36, 0, %s35
      %s39 = sadd.s32 %s38, 1
      %p42 = scmp.eq.s32.totalorder %s18, 9
      %p43 = scmp.ne.s32.totalorder %s38, %s40
      %p44 = scmp.eq.s32.totalorder %s18, 0
      %p45 = por %p43, %p44
      %p46 = scmp.ne.s32.totalorder %s38, %s40
      %p47 = scmp.eq.s32.totalorder %s23, 9
      %p48 = por %p46, %p47
      %p49 = scmp.ne.s32.totalorder %s40, %s41
      %p50 = scmp.eq.s32.totalorder %s23, 0
      %p51 = por %p49, %p50
      %p52 = scmp.ne.s32.totalorder %s40, %s41
      %p53 = scmp.eq.s32.totalorder %s24, 9
      %p54 = por %p52, %p53
      %p56 = scmp.ne.s32.totalorder %s41, %s55
      %p57 = scmp.eq.s32.totalorder %s24, 0
      %p58 = por %p56, %p57
      %s60 = sadd.s32 %s59, 1
      %p63 = scmp.eq.s32.totalorder %s18, 9
      %p64 = scmp.ne.s32.totalorder %s59, %s61
      %p65 = scmp.eq.s32.totalorder %s18, 0
      %p66 = por %p64, %p65
      %p67 = scmp.ne.s32.totalorder %s59, %s61
      %p68 = scmp.eq.s32.totalorder %s23, 9
      %p69 = por %p67, %p68
      %p70 = scmp.ne.s32.totalorder %s61, %s62
      %p71 = scmp.eq.s32.totalorder %s23, 0
      %p72 = por %p70, %p71
      %p73 = scmp.ne.s32.totalorder %s61, %s62
      %p74 = scmp.eq.s32.totalorder %s24, 9
      %p75 = por %p73, %p74
      %p77 = scmp.ne.s32.totalorder %s62, %s76
      %p78 = scmp.eq.s32.totalorder %s24, 0
      %p79 = por %p77, %p78
      %p80 = scmp.eq.s32.totalorder %s25, 9
      %s81 = scalar_select %p80, %s26, 0
      %p82 = scmp.eq.s32.totalorder %s37, 9
      %s83 = scalar_select %p82, %s33, 0
      %s84 = ssub.s32 %s81, %s83
      %p85 = scmp.eq.s32.totalorder %s84, 0
      %s87 = sadd.s32 %s86, 1
      %s88 = scalar_select %p85, %s86, %s87
      %p91 = pneg %p85
      %p92 = scmp.eq.s32.totalorder %s18, 9
      %p93 = por %p91, %p92
      %p94 = scmp.ne.s32.totalorder %s86, %s89
      %p95 = scmp.eq.s32.totalorder %s18, 0
      %p96 = por %p94, %p95
      %p97 = scmp.ne.s32.totalorder %s86, %s89
      %p98 = scmp.eq.s32.totalorder %s23, 9
      %p99 = por %p97, %p98
      %p100 = scmp.ne.s32.totalorder %s89, %s90
      %p101 = scmp.eq.s32.totalorder %s23, 0
      %p102 = por %p100, %p101
      %p103 = scmp.ne.s32.totalorder %s89, %s90
      %p104 = scmp.eq.s32.totalorder %s24, 9
      %p105 = por %p103, %p104
      %p107 = scmp.ne.s32.totalorder %s90, %s106
      %p108 = scmp.eq.s32.totalorder %s24, 0
      %p109 = por %p107, %p108
      %p110 = scmp.le.s32.totalorder 1, %s18
      %p111 = scmp.lt.s32.totalorder %s18, 11
      %p112 = pnand %p110, %p111
      %p113 = pneg %p112
      // Predicated region
      $region9: #{tpu_custom_call.1} parent=5 // pred_check
        _
      $region10: #{tpu_custom_call.1} parent=5 // pred_check_branch
        %115 = sbr.rel (%p112) target = $region12
      $region11: #{tpu_custom_call.1} parent=5 // pred_region
        %s116 = ssub.s32 %s18, 1
        // Predicated region
        $region13: #{tpu_custom_call.1} parent=11 // pred_check
          %p117 = pneg %p51
        $region14: #{tpu_custom_call.1} parent=11 // pred_check_branch
          %119 = sbr.rel (%p117) target = $region16
        $region15: #{tpu_custom_call.1} parent=11 // pred_region
          %s121 = ssub.s32 2048, 2048
          %122 = vsyncadd [#allocation7], %s121
          %s123 = sshll.u32 [#allocation6], 4
          %s124 = int_to_ptr.vmem [resolvable:$true] %s123
          %129 = dma.hbm_to_vmem [thread:$0]  %s1, 2048, %s124, [#allocation7], 64, 64, 4
        $region16: #{tpu_custom_call.1} parent=11 // pred_fallthru
          _
        // Predicated region
        $region17: #{tpu_custom_call.1} parent=11 // pred_check
          %p130 = pneg %p72
        $region18: #{tpu_custom_call.1} parent=11 // pred_check_branch
          %132 = sbr.rel (%p130) target = $region20
        $region19: #{tpu_custom_call.1} parent=11 // pred_region
          %s134 = ssub.s32 4096, 4096
          %135 = vsyncadd [#allocation10], %s134
          %s136 = sshll.u32 [#allocation9], 4
          %s137 = int_to_ptr.vmem [resolvable:$true] %s136
          %142 = dma.hbm_to_vmem [thread:$0]  %s2, 4096, %s137, [#allocation10], 128, 128, 8
        $region20: #{tpu_custom_call.1} parent=11 // pred_fallthru
          _
      $region12: #{tpu_custom_call.1} parent=5 // pred_fallthru
        _
      %p143 = scmp.lt.s32.totalorder %s18, 10
      // Predicated region
      $region21: #{tpu_custom_call.1} parent=5 // pred_check
        %p144 = pneg %p143
      $region22: #{tpu_custom_call.1} parent=5 // pred_check_branch
        %146 = sbr.rel (%p144) target = $region24
      $region23: #{tpu_custom_call.1} parent=5 // pred_region
        _
      $region24: #{tpu_custom_call.1} parent=5 // pred_fallthru
        _
      %p147 = scmp.le.s32.totalorder 1, %s18
      %p148 = scmp.lt.s32.totalorder %s18, 11
      %p149 = pnand %p147, %p148
      %p150 = pneg %p149
      // Predicated region
      $region25: #{tpu_custom_call.1} parent=5 // pred_check
        _
      $region26: #{tpu_custom_call.1} parent=5 // pred_check_branch
        %152 = sbr.rel (%p149) target = $region28
      $region27: #{tpu_custom_call.1} parent=5 // pred_region
        %s153 = ssub.s32 %s18, 1
        // Predicated region
        $region29: #{tpu_custom_call.1} parent=27 // pred_check
          %p154 = pneg %p51
        $region30: #{tpu_custom_call.1} parent=27 // pred_check_branch
          %156 = sbr.rel (%p154) target = $region32
        $region31: #{tpu_custom_call.1} parent=27 // pred_region
          %157 = dma.done [#allocation7], 2048
        $region32: #{tpu_custom_call.1} parent=27 // pred_fallthru
          _
        // Predicated region
        $region33: #{tpu_custom_call.1} parent=27 // pred_check
          %p158 = pneg %p72
        $region34: #{tpu_custom_call.1} parent=27 // pred_check_branch
          %160 = sbr.rel (%p158) target = $region36
        $region35: #{tpu_custom_call.1} parent=27 // pred_region
          %161 = dma.done [#allocation10], 4096
        $region36: #{tpu_custom_call.1} parent=27 // pred_fallthru
          _
        %p162 = pneg %p51
        %p163 = pneg %p48
        %p164 = pneg %p72
        %p165 = pneg %p69
        %p166 = pneg %p102
        %p167 = pneg %p99
        %s168 = sand.u32 %s89, 1
        %s169 = scalar_lea.sflag [#allocation8], %s168
        %s170 = sand.u32 %s89, 1
        %s171 = smul.addr %s170, 256
        %s172 = scalar_lea.vmem [#allocation11], %s171
        %p173 = scmp.eq.s32.totalorder %s27, 9
        %s174 = scalar_select %p173, %s28, 0
        %s175 = smul.u32 32, %s174
        %s177 = smul.u32 %s28, 256
        %p178 = scmp.eq.s32.totalorder %s27, 0
        // Predicated region
        $region37: #{tpu_custom_call.1} parent=27 // pred_check
          %p179 = pneg %p178
        $region38: #{tpu_custom_call.1} parent=27 // pred_check_branch
          %181 = sbr.rel (%p179) target = $region40
        $region39: #{tpu_custom_call.1} parent=27 // pred_region
          %p182 = scmp.eq.s32.totalorder %s28, 0
          // Predicated region
          $region41: #{tpu_custom_call.1} parent=39 // pred_check
            %p183 = pneg %p182
          $region42: #{tpu_custom_call.1} parent=39 // pred_check_branch
            %185 = sbr.rel (%p183) target = $region44
          $region43: #{tpu_custom_call.1} parent=39 // pred_region
            %v186 = vld [vmem:[#allocation6] sm:$0xf]
            %v187 = vld [vmem:[#allocation6 + $0x4] sm:$0xf]
            %v188 = vld [vmem:[#allocation6 + $0x8] sm:$0xf]
            %v189 = vld [vmem:[#allocation6 + $0xc] sm:$0xf]
            %v190 = vld [vmem:[#allocation6 + $0x10] sm:$0xf]
            %v191 = vld [vmem:[#allocation6 + $0x14] sm:$0xf]
            %v192 = vld [vmem:[#allocation6 + $0x18] sm:$0xf]
            %v193 = vld [vmem:[#allocation6 + $0x1c] sm:$0xf]
            %v194 = vld [vmem:[#allocation6 + $0x20] sm:$0xf]
            %v195 = vld [vmem:[#allocation6 + $0x24] sm:$0xf]
            %v196 = vld [vmem:[#allocation6 + $0x28] sm:$0xf]
            %v197 = vld [vmem:[#allocation6 + $0x2c] sm:$0xf]
            %v198 = vld [vmem:[#allocation6 + $0x30] sm:$0xf]
            %v199 = vld [vmem:[#allocation6 + $0x34] sm:$0xf]
            %v200 = vld [vmem:[#allocation6 + $0x38] sm:$0xf]
            %v201 = vld [vmem:[#allocation6 + $0x3c] sm:$0xf]
            %v202 = vld [vmem:[#allocation6 + $0x40] sm:$0xf]
            %v203 = vld [vmem:[#allocation6 + $0x44] sm:$0xf]
            %v204 = vld [vmem:[#allocation6 + $0x48] sm:$0xf]
            %v205 = vld [vmem:[#allocation6 + $0x4c] sm:$0xf]
            %v206 = vld [vmem:[#allocation6 + $0x50] sm:$0xf]
            %v207 = vld [vmem:[#allocation6 + $0x54] sm:$0xf]
            %v208 = vld [vmem:[#allocation6 + $0x58] sm:$0xf]
            %v209 = vld [vmem:[#allocation6 + $0x5c] sm:$0xf]
            %v210 = vld [vmem:[#allocation6 + $0x60] sm:$0xf]
            %v211 = vld [vmem:[#allocation6 + $0x64] sm:$0xf]
            %v212 = vld [vmem:[#allocation6 + $0x68] sm:$0xf]
            %v213 = vld [vmem:[#allocation6 + $0x6c] sm:$0xf]
            %v214 = vld [vmem:[#allocation6 + $0x70] sm:$0xf]
            %v215 = vld [vmem:[#allocation6 + $0x74] sm:$0xf]
            %v216 = vld [vmem:[#allocation6 + $0x78] sm:$0xf]
            %v217 = vld [vmem:[#allocation6 + $0x7c] sm:$0xf]
            %218 = vst [vmem:[#allocation2] sm:$0xf] %v186
            %219 = vst [vmem:[#allocation2 + $0x4] sm:$0xf] %v187
            %220 = vst [vmem:[#allocation2 + $0x8] sm:$0xf] %v188
            %221 = vst [vmem:[#allocation2 + $0xc] sm:$0xf] %v189
            %222 = vst [vmem:[#allocation2 + $0x10] sm:$0xf] %v190
            %223 = vst [vmem:[#allocation2 + $0x14] sm:$0xf] %v191
            %224 = vst [vmem:[#allocation2 + $0x18] sm:$0xf] %v192
            %225 = vst [vmem:[#allocation2 + $0x1c] sm:$0xf] %v193
            %226 = vst [vmem:[#allocation2 + $0x20] sm:$0xf] %v194
            %227 = vst [vmem:[#allocation2 + $0x24] sm:$0xf] %v195
            %228 = vst [vmem:[#allocation2 + $0x28] sm:$0xf] %v196
            %229 = vst [vmem:[#allocation2 + $0x2c] sm:$0xf] %v197
            %230 = vst [vmem:[#allocation2 + $0x30] sm:$0xf] %v198
            %231 = vst [vmem:[#allocation2 + $0x34] sm:$0xf] %v199
            %232 = vst [vmem:[#allocation2 + $0x38] sm:$0xf] %v200
            %233 = vst [vmem:[#allocation2 + $0x3c] sm:$0xf] %v201
            %234 = vst [vmem:[#allocation2 + $0x40] sm:$0xf] %v202
            %235 = vst [vmem:[#allocation2 + $0x44] sm:$0xf] %v203
            %236 = vst [vmem:[#allocation2 + $0x48] sm:$0xf] %v204
            %237 = vst [vmem:[#allocation2 + $0x4c] sm:$0xf] %v205
            %238 = vst [vmem:[#allocation2 + $0x50] sm:$0xf] %v206
            %239 = vst [vmem:[#allocation2 + $0x54] sm:$0xf] %v207
            %240 = vst [vmem:[#allocation2 + $0x58] sm:$0xf] %v208
            %241 = vst [vmem:[#allocation2 + $0x5c] sm:$0xf] %v209
            %242 = vst [vmem:[#allocation2 + $0x60] sm:$0xf] %v210
            %243 = vst [vmem:[#allocation2 + $0x64] sm:$0xf] %v211
            %244 = vst [vmem:[#allocation2 + $0x68] sm:$0xf] %v212
            %245 = vst [vmem:[#allocation2 + $0x6c] sm:$0xf] %v213
            %246 = vst [vmem:[#allocation2 + $0x70] sm:$0xf] %v214
            %247 = vst [vmem:[#allocation2 + $0x74] sm:$0xf] %v215
            %248 = vst [vmem:[#allocation2 + $0x78] sm:$0xf] %v216
            %249 = vst [vmem:[#allocation2 + $0x7c] sm:$0xf] %v217
          $region44: #{tpu_custom_call.1} parent=39 // pred_fallthru
            _
          %s250 = sld [smem:[#allocation5]]
          %s251 = sshra.s32 %s177, 3
          %s252 = sand.u32 %s177, 7
          %s253 = smul.addr %s251, 4
          %s254 = scalar_lea.vmem [#allocation6], %s253
          %v255 = vld [vmem:[%s254] sm:$0xf]
          %v256 = vld [vmem:[%s254 + $0x4] sm:$0xf]
          %v257 = vld [vmem:[%s254 + $0x8] sm:$0xf]
          %v258 = vld [vmem:[%s254 + $0xc] sm:$0xf]
          %v259 = vld [vmem:[%s254 + $0x10] sm:$0xf]
          %v260 = vld [vmem:[%s254 + $0x14] sm:$0xf]
          %v261 = vld [vmem:[%s254 + $0x18] sm:$0xf]
          %v262 = vld [vmem:[%s254 + $0x1c] sm:$0xf]
          %v263 = vld [vmem:[%s254 + $0x20] sm:$0xf]
          %v264 = vld [vmem:[%s254 + $0x24] sm:$0xf]
          %v265 = vld [vmem:[%s254 + $0x28] sm:$0xf]
          %v266 = vld [vmem:[%s254 + $0x2c] sm:$0xf]
          %v267 = vld [vmem:[%s254 + $0x30] sm:$0xf]
          %v268 = vld [vmem:[%s254 + $0x34] sm:$0xf]
          %v269 = vld [vmem:[%s254 + $0x38] sm:$0xf]
          %v270 = vld [vmem:[%s254 + $0x3c] sm:$0xf]
          %v271 = vld [vmem:[%s254 + $0x40] sm:$0xf]
          %v272 = vld [vmem:[%s254 + $0x44] sm:$0xf]
          %v273 = vld [vmem:[%s254 + $0x48] sm:$0xf]
          %v274 = vld [vmem:[%s254 + $0x4c] sm:$0xf]
          %v275 = vld [vmem:[%s254 + $0x50] sm:$0xf]
          %v276 = vld [vmem:[%s254 + $0x54] sm:$0xf]
          %v277 = vld [vmem:[%s254 + $0x58] sm:$0xf]
          %v278 = vld [vmem:[%s254 + $0x5c] sm:$0xf]
          %v279 = vld [vmem:[%s254 + $0x60] sm:$0xf]
          %v280 = vld [vmem:[%s254 + $0x64] sm:$0xf]
          %v281 = vld [vmem:[%s254 + $0x68] sm:$0xf]
          %v282 = vld [vmem:[%s254 + $0x6c] sm:$0xf]
          %v283 = vld [vmem:[%s254 + $0x70] sm:$0xf]
          %v284 = vld [vmem:[%s254 + $0x74] sm:$0xf]
          %v285 = vld [vmem:[%s254 + $0x78] sm:$0xf]
          %v286 = vld [vmem:[%s254 + $0x7c] sm:$0xf]
          %v287 = vunpack.c.l.bf16 %v255
          %v288 = vunpack.c.l.bf16 %v256
          %v289 = vunpack.c.l.bf16 %v257
          %v290 = vunpack.c.l.bf16 %v258
          %v291 = vunpack.c.l.bf16 %v259
          %v292 = vunpack.c.l.bf16 %v260
          %v293 = vunpack.c.l.bf16 %v261
          %v294 = vunpack.c.l.bf16 %v262
          %v295 = vunpack.c.l.bf16 %v263
          %v296 = vunpack.c.l.bf16 %v264
          %v297 = vunpack.c.l.bf16 %v265
          %v298 = vunpack.c.l.bf16 %v266
          %v299 = vunpack.c.l.bf16 %v267
          %v300 = vunpack.c.l.bf16 %v268
          %v301 = vunpack.c.l.bf16 %v269
          %v302 = vunpack.c.l.bf16 %v270
          %v303 = vunpack.c.l.bf16 %v271
          %v304 = vunpack.c.l.bf16 %v272
          %v305 = vunpack.c.l.bf16 %v273
          %v306 = vunpack.c.l.bf16 %v274
          %v307 = vunpack.c.l.bf16 %v275
          %v308 = vunpack.c.l.bf16 %v276
          %v309 = vunpack.c.l.bf16 %v277
          %v310 = vunpack.c.l.bf16 %v278
          %v311 = vunpack.c.l.bf16 %v279
          %v312 = vunpack.c.l.bf16 %v280
          %v313 = vunpack.c.l.bf16 %v281
          %v314 = vunpack.c.l.bf16 %v282
          %v315 = vunpack.c.l.bf16 %v283
          %v316 = vunpack.c.l.bf16 %v284
          %v317 = vunpack.c.l.bf16 %v285
          %v318 = vunpack.c.l.bf16 %v286
          %v319 = vstv %s250
          %v320 = vmul.f32 %v319, %v287
          %v321 = vmul.f32 %v319, %v288
          %v322 = vmul.f32 %v319, %v289
          %v323 = vmul.f32 %v319, %v290
          %v324 = vmul.f32 %v319, %v291
          %v325 = vmul.f32 %v319, %v292
          %v326 = vmul.f32 %v319, %v293
          %v327 = vmul.f32 %v319, %v294
          %v328 = vmul.f32 %v319, %v295
          %v329 = vmul.f32 %v319, %v296
          %v330 = vmul.f32 %v319, %v297
          %v331 = vmul.f32 %v319, %v298
          %v332 = vmul.f32 %v319, %v299
          %v333 = vmul.f32 %v319, %v300
          %v334 = vmul.f32 %v319, %v301
          %v335 = vmul.f32 %v319, %v302
          %v336 = vmul.f32 %v319, %v303
          %v337 = vmul.f32 %v319, %v304
          %v338 = vmul.f32 %v319, %v305
          %v339 = vmul.f32 %v319, %v306
          %v340 = vmul.f32 %v319, %v307
          %v341 = vmul.f32 %v319, %v308
          %v342 = vmul.f32 %v319, %v309
          %v343 = vmul.f32 %v319, %v310
          %v344 = vmul.f32 %v319, %v311
          %v345 = vmul.f32 %v319, %v312
          %v346 = vmul.f32 %v319, %v313
          %v347 = vmul.f32 %v319, %v314
          %v348 = vmul.f32 %v319, %v315
          %v349 = vmul.f32 %v319, %v316
          %v350 = vmul.f32 %v319, %v317
          %v351 = vmul.f32 %v319, %v318
          %s352 = scalar_lea.vmem [#allocation3], %s177
          %353 = vst [vmem:[%s352] sm:$0xff] %v320
          %354 = vst [vmem:[%s352 + $0x8] sm:$0xff] %v321
          %355 = vst [vmem:[%s352 + $0x10] sm:$0xff] %v322
          %356 = vst [vmem:[%s352 + $0x18] sm:$0xff] %v323
          %357 = vst [vmem:[%s352 + $0x20] sm:$0xff] %v324
          %358 = vst [vmem:[%s352 + $0x28] sm:$0xff] %v325
          %359 = vst [vmem:[%s352 + $0x30] sm:$0xff] %v326
          %360 = vst [vmem:[%s352 + $0x38] sm:$0xff] %v327
          %361 = vst [vmem:[%s352 + $0x40] sm:$0xff] %v328
          %362 = vst [vmem:[%s352 + $0x48] sm:$0xff] %v329
          %363 = vst [vmem:[%s352 + $0x50] sm:$0xff] %v330
          %364 = vst [vmem:[%s352 + $0x58] sm:$0xff] %v331
          %365 = vst [vmem:[%s352 + $0x60] sm:$0xff] %v332
          %366 = vst [vmem:[%s352 + $0x68] sm:$0xff] %v333
          %367 = vst [vmem:[%s352 + $0x70] sm:$0xff] %v334
          %368 = vst [vmem:[%s352 + $0x78] sm:$0xff] %v335
          %369 = vst [vmem:[%s352 + $0x80] sm:$0xff] %v336
          %370 = vst [vmem:[%s352 + $0x88] sm:$0xff] %v337
          %371 = vst [vmem:[%s352 + $0x90] sm:$0xff] %v338
          %372 = vst [vmem:[%s352 + $0x98] sm:$0xff] %v339
          %373 = vst [vmem:[%s352 + $0xa0] sm:$0xff] %v340
          %374 = vst [vmem:[%s352 + $0xa8] sm:$0xff] %v341
          %375 = vst [vmem:[%s352 + $0xb0] sm:$0xff] %v342
          %376 = vst [vmem:[%s352 + $0xb8] sm:$0xff] %v343
          %377 = vst [vmem:[%s352 + $0xc0] sm:$0xff] %v344
          %378 = vst [vmem:[%s352 + $0xc8] sm:$0xff] %v345
          %379 = vst [vmem:[%s352 + $0xd0] sm:$0xff] %v346
          %380 = vst [vmem:[%s352 + $0xd8] sm:$0xff] %v347
          %381 = vst [vmem:[%s352 + $0xe0] sm:$0xff] %v348
          %382 = vst [vmem:[%s352 + $0xe8] sm:$0xff] %v349
          %383 = vst [vmem:[%s352 + $0xf0] sm:$0xff] %v350
          %384 = vst [vmem:[%s352 + $0xf8] sm:$0xff] %v351
        $region40: #{tpu_custom_call.1} parent=27 // pred_fallthru
          _
        %p385 = scmp.lt.s32.totalorder %s27, 0
        %s386 = ssub.s32 0, %s27
        %s387 = scalar_select %p385, %s386, %s27
        %s388 = sand.u32 %s387, 1
        %s389 = ssub.s32 0, %s388
        %s390 = scalar_select %p385, %s389, %s388
        %p391 = scmp.ne.s32.totalorder %s390, 0
        %p392 = scmp.lt.s32.totalorder %s390, 0
        %p393 = pnand %p392, %p391
        %p394 = pneg %p393
        %s395 = sadd.s32 %s390, 2
        %s396 = scalar_select %p394, %s395, %s390
        %s397 = ssub.s32 1, %s396
        %s398 = sshra.s32 %s177, 3
        %s399 = sand.u32 %s177, 7
        %s400 = smul.u32 %s398, 2
        %s401 = smul.addr %s400, 4
        %s402 = scalar_lea.vmem [#allocation9], %s401
        %v403 = vld [vmem:[%s402] sm:$0xff]
        %v404 = vld [vmem:[%s402 + $0x8] sm:$0xff]
        %v405 = vld [vmem:[%s402 + $0x10] sm:$0xff]
        %v406 = vld [vmem:[%s402 + $0x18] sm:$0xff]
        %v407 = vld [vmem:[%s402 + $0x20] sm:$0xff]
        %v408 = vld [vmem:[%s402 + $0x28] sm:$0xff]
        %v409 = vld [vmem:[%s402 + $0x30] sm:$0xff]
        %v410 = vld [vmem:[%s402 + $0x38] sm:$0xff]
        %v411 = vld [vmem:[%s402 + $0x40] sm:$0xff]
        %v412 = vld [vmem:[%s402 + $0x48] sm:$0xff]
        %v413 = vld [vmem:[%s402 + $0x50] sm:$0xff]
        %v414 = vld [vmem:[%s402 + $0x58] sm:$0xff]
        %v415 = vld [vmem:[%s402 + $0x60] sm:$0xff]
        %v416 = vld [vmem:[%s402 + $0x68] sm:$0xff]
        %v417 = vld [vmem:[%s402 + $0x70] sm:$0xff]
        %v418 = vld [vmem:[%s402 + $0x78] sm:$0xff]
        %v419 = vld [vmem:[%s402 + $0x80] sm:$0xff]
        %v420 = vld [vmem:[%s402 + $0x88] sm:$0xff]
        %v421 = vld [vmem:[%s402 + $0x90] sm:$0xff]
        %v422 = vld [vmem:[%s402 + $0x98] sm:$0xff]
        %v423 = vld [vmem:[%s402 + $0xa0] sm:$0xff]
        %v424 = vld [vmem:[%s402 + $0xa8] sm:$0xff]
        %v425 = vld [vmem:[%s402 + $0xb0] sm:$0xff]
        %v426 = vld [vmem:[%s402 + $0xb8] sm:$0xff]
        %v427 = vld [vmem:[%s402 + $0xc0] sm:$0xff]
        %v428 = vld [vmem:[%s402 + $0xc8] sm:$0xff]
        %v429 = vld [vmem:[%s402 + $0xd0] sm:$0xff]
        %v430 = vld [vmem:[%s402 + $0xd8] sm:$0xff]
        %v431 = vld [vmem:[%s402 + $0xe0] sm:$0xff]
        %v432 = vld [vmem:[%s402 + $0xe8] sm:$0xff]
        %v433 = vld [vmem:[%s402 + $0xf0] sm:$0xff]
        %v434 = vld [vmem:[%s402 + $0xf8] sm:$0xff]
        %s435 = smul.u32 %s396, 32
        %s436 = smul.addr %s435, 4
        %s437 = scalar_lea.vmem [#allocation2], %s436
        %v438 = vld [vmem:[%s437] sm:$0xf]
        %v439 = vld [vmem:[%s437 + $0x4] sm:$0xf]
        %v440 = vld [vmem:[%s437 + $0x8] sm:$0xf]
        %v441 = vld [vmem:[%s437 + $0xc] sm:$0xf]
        %v442 = vld [vmem:[%s437 + $0x10] sm:$0xf]
        %v443 = vld [vmem:[%s437 + $0x14] sm:$0xf]
        %v444 = vld [vmem:[%s437 + $0x18] sm:$0xf]
        %v445 = vld [vmem:[%s437 + $0x1c] sm:$0xf]
        %v446 = vld [vmem:[%s437 + $0x20] sm:$0xf]
        %v447 = vld [vmem:[%s437 + $0x24] sm:$0xf]
        %v448 = vld [vmem:[%s437 + $0x28] sm:$0xf]
        %v449 = vld [vmem:[%s437 + $0x2c] sm:$0xf]
        %v450 = vld [vmem:[%s437 + $0x30] sm:$0xf]
        %v451 = vld [vmem:[%s437 + $0x34] sm:$0xf]
        %v452 = vld [vmem:[%s437 + $0x38] sm:$0xf]
        %v453 = vld [vmem:[%s437 + $0x3c] sm:$0xf]
        %v454 = vld [vmem:[%s437 + $0x40] sm:$0xf]
        %v455 = vld [vmem:[%s437 + $0x44] sm:$0xf]
        %v456 = vld [vmem:[%s437 + $0x48] sm:$0xf]
        %v457 = vld [vmem:[%s437 + $0x4c] sm:$0xf]
        %v458 = vld [vmem:[%s437 + $0x50] sm:$0xf]
        %v459 = vld [vmem:[%s437 + $0x54] sm:$0xf]
        %v460 = vld [vmem:[%s437 + $0x58] sm:$0xf]
        %v461 = vld [vmem:[%s437 + $0x5c] sm:$0xf]
        %v462 = vld [vmem:[%s437 + $0x60] sm:$0xf]
        %v463 = vld [vmem:[%s437 + $0x64] sm:$0xf]
        %v464 = vld [vmem:[%s437 + $0x68] sm:$0xf]
        %v465 = vld [vmem:[%s437 + $0x6c] sm:$0xf]
        %v466 = vld [vmem:[%s437 + $0x70] sm:$0xf]
        %v467 = vld [vmem:[%s437 + $0x74] sm:$0xf]
        %v468 = vld [vmem:[%s437 + $0x78] sm:$0xf]
        %v469 = vld [vmem:[%s437 + $0x7c] sm:$0xf]
        %v502 = vunpack.c.l.b16 %v403
        %v503 = vunpack.c.h.b16 %v403
        %v504 = vunpack.c.l.b16 %v404
        %v505 = vunpack.c.h.b16 %v404
        %v506 = vunpack.c.l.b16 %v405
        %v507 = vunpack.c.h.b16 %v405
        %v508 = vunpack.c.l.b16 %v406
        %v509 = vunpack.c.h.b16 %v406
        %v510 = vunpack.c.l.b16 %v407
        %v511 = vunpack.c.h.b16 %v407
        %v512 = vunpack.c.l.b16 %v408
        %v513 = vunpack.c.h.b16 %v408
        %v514 = vunpack.c.l.b16 %v409
        %v515 = vunpack.c.h.b16 %v409
        %v516 = vunpack.c.l.b16 %v410
        %v517 = vunpack.c.h.b16 %v410
        %v518 = vunpack.c.l.b16 %v411
        %v519 = vunpack.c.h.b16 %v411
        %v520 = vunpack.c.l.b16 %v412
        %v521 = vunpack.c.h.b16 %v412
        %v522 = vunpack.c.l.b16 %v413
        %v523 = vunpack.c.h.b16 %v413
        %v524 = vunpack.c.l.b16 %v414
        %v525 = vunpack.c.h.b16 %v414
        %v526 = vunpack.c.l.b16 %v415
        %v527 = vunpack.c.h.b16 %v415
        %v528 = vunpack.c.l.b16 %v416
        %v529 = vunpack.c.h.b16 %v416
        %v530 = vunpack.c.l.b16 %v417
        %v531 = vunpack.c.h.b16 %v417
        %v532 = vunpack.c.l.b16 %v418
        %v533 = vunpack.c.h.b16 %v418
        %v534 = vunpack.c.l.b16 %v419
        %v535 = vunpack.c.h.b16 %v419
        %v536 = vunpack.c.l.b16 %v420
        %v537 = vunpack.c.h.b16 %v420
        %v538 = vunpack.c.l.b16 %v421
        %v539 = vunpack.c.h.b16 %v421
        %v540 = vunpack.c.l.b16 %v422
        %v541 = vunpack.c.h.b16 %v422
        %v542 = vunpack.c.l.b16 %v423
        %v543 = vunpack.c.h.b16 %v423
        %v544 = vunpack.c.l.b16 %v424
        %v545 = vunpack.c.h.b16 %v424
        %v546 = vunpack.c.l.b16 %v425
        %v547 = vunpack.c.h.b16 %v425
        %v548 = vunpack.c.l.b16 %v426
        %v549 = vunpack.c.h.b16 %v426
        %v550 = vunpack.c.l.b16 %v427
        %v551 = vunpack.c.h.b16 %v427
        %v552 = vunpack.c.l.b16 %v428
        %v553 = vunpack.c.h.b16 %v428
        %v554 = vunpack.c.l.b16 %v429
        %v555 = vunpack.c.h.b16 %v429
        %v556 = vunpack.c.l.b16 %v430
        %v557 = vunpack.c.h.b16 %v430
        %v558 = vunpack.c.l.b16 %v431
        %v559 = vunpack.c.h.b16 %v431
        %v560 = vunpack.c.l.b16 %v432
        %v561 = vunpack.c.h.b16 %v432
        %v562 = vunpack.c.l.b16 %v433
        %v563 = vunpack.c.h.b16 %v433
        %v564 = vunpack.c.l.b16 %v434
        %v565 = vunpack.c.h.b16 %v434
        %v566 = vpack.c.b16 %v504, %v502
        %v567 = vpack.c.b16 %v505, %v503
        %v568 = vpack.c.b16 %v508, %v506
        %v569 = vpack.c.b16 %v509, %v507
        %v570 = vpack.c.b16 %v512, %v510
        %v571 = vpack.c.b16 %v513, %v511
        %v572 = vpack.c.b16 %v516, %v514
        %v573 = vpack.c.b16 %v517, %v515
        %v574 = vpack.c.b16 %v520, %v518
        %v575 = vpack.c.b16 %v521, %v519
        %v576 = vpack.c.b16 %v524, %v522
        %v577 = vpack.c.b16 %v525, %v523
        %v578 = vpack.c.b16 %v528, %v526
        %v579 = vpack.c.b16 %v529, %v527
        %v580 = vpack.c.b16 %v532, %v530
        %v581 = vpack.c.b16 %v533, %v531
        %v582 = vpack.c.b16 %v536, %v534
        %v583 = vpack.c.b16 %v537, %v535
        %v584 = vpack.c.b16 %v540, %v538
        %v585 = vpack.c.b16 %v541, %v539
        %v586 = vpack.c.b16 %v544, %v542
        %v587 = vpack.c.b16 %v545, %v543
        %v588 = vpack.c.b16 %v548, %v546
        %v589 = vpack.c.b16 %v549, %v547
        %v590 = vpack.c.b16 %v552, %v550
        %v591 = vpack.c.b16 %v553, %v551
        %v592 = vpack.c.b16 %v556, %v554
        %v593 = vpack.c.b16 %v557, %v555
        %v594 = vpack.c.b16 %v560, %v558
        %v595 = vpack.c.b16 %v561, %v559
        %v596 = vpack.c.b16 %v564, %v562
        %v597 = vpack.c.b16 %v565, %v563
        %v662 = vunpack.c.l.b16 %v438
        %v663 = vunpack.c.l.b16 %v439
        %v664 = vunpack.c.l.b16 %v440
        %v665 = vunpack.c.l.b16 %v441
        %v666 = vunpack.c.l.b16 %v442
        %v667 = vunpack.c.l.b16 %v443
        %v668 = vunpack.c.l.b16 %v444
        %v669 = vunpack.c.l.b16 %v445
        %v670 = vunpack.c.l.b16 %v446
        %v671 = vunpack.c.l.b16 %v447
        %v672 = vunpack.c.l.b16 %v448
        %v673 = vunpack.c.l.b16 %v449
        %v674 = vunpack.c.l.b16 %v450
        %v675 = vunpack.c.l.b16 %v451
        %v676 = vunpack.c.l.b16 %v452
        %v677 = vunpack.c.l.b16 %v453
        %v678 = vunpack.c.l.b16 %v454
        %v679 = vunpack.c.l.b16 %v455
        %v680 = vunpack.c.l.b16 %v456
        %v681 = vunpack.c.l.b16 %v457
        %v682 = vunpack.c.l.b16 %v458
        %v683 = vunpack.c.l.b16 %v459
        %v684 = vunpack.c.l.b16 %v460
        %v685 = vunpack.c.l.b16 %v461
        %v686 = vunpack.c.l.b16 %v462
        %v687 = vunpack.c.l.b16 %v463
        %v688 = vunpack.c.l.b16 %v464
        %v689 = vunpack.c.l.b16 %v465
        %v690 = vunpack.c.l.b16 %v466
        %v691 = vunpack.c.l.b16 %v467
        %v692 = vunpack.c.l.b16 %v468
        %v693 = vunpack.c.l.b16 %v469
        %v694 = vpack.c.b16 %v663, %v662
        %v695 = vpack.c.b16 %v665, %v664
        %v696 = vpack.c.b16 %v667, %v666
        %v697 = vpack.c.b16 %v669, %v668
        %v698 = vpack.c.b16 %v671, %v670
        %v699 = vpack.c.b16 %v673, %v672
        %v700 = vpack.c.b16 %v675, %v674
        %v701 = vpack.c.b16 %v677, %v676
        %v702 = vpack.c.b16 %v679, %v678
        %v703 = vpack.c.b16 %v681, %v680
        %v704 = vpack.c.b16 %v683, %v682
        %v705 = vpack.c.b16 %v685, %v684
        %v706 = vpack.c.b16 %v687, %v686
        %v707 = vpack.c.b16 %v689, %v688
        %v708 = vpack.c.b16 %v691, %v690
        %v709 = vpack.c.b16 %v693, %v692
        %726 = vmatprep.subr.bf16.mxu0 0
        %727 = vmatpush1.bf16.msra.mxu0 %v701
        %728 = vmatprep.subr.bf16.mxu0 0
        %729 = vmatpush1.bf16.msra.mxu0 %v700
        %730 = vmatprep.subr.bf16.mxu0 0
        %731 = vmatpush1.bf16.msra.mxu0 %v699
        %732 = vmatprep.subr.bf16.mxu0 0
        %733 = vmatpush1.bf16.msra.mxu0 %v698
        %734 = vmatprep.subr.bf16.mxu0 0
        %735 = vmatpush1.bf16.msra.mxu0 %v697
        %736 = vmatprep.subr.bf16.mxu0 0
        %737 = vmatpush1.bf16.msra.mxu0 %v696
        %738 = vmatprep.subr.bf16.mxu0 0
        %739 = vmatpush1.bf16.msra.mxu0 %v695
        %740 = vmatprep.subr.bf16.mxu0 0
        %741 = vmatpush1.bf16.msra.mxu0 %v694
        %742 = vmatprep.subr.bf16.mxu0 0
        %743 = vmatpush2.bf16.msra.mxu0 %v709
        %744 = vmatprep.subr.bf16.mxu0 0
        %745 = vmatpush2.bf16.msra.mxu0 %v708
        %746 = vmatprep.subr.bf16.mxu0 0
        %747 = vmatpush2.bf16.msra.mxu0 %v707
        %748 = vmatprep.subr.bf16.mxu0 0
        %749 = vmatpush2.bf16.msra.mxu0 %v706
        %750 = vmatprep.subr.bf16.mxu0 0
        %751 = vmatpush2.bf16.msra.mxu0 %v705
        %752 = vmatprep.subr.bf16.mxu0 0
        %753 = vmatpush2.bf16.msra.mxu0 %v704
        %754 = vmatprep.subr.bf16.mxu0 0
        %755 = vmatpush2.bf16.msra.mxu0 %v703
        %756 = vmatprep.subr.bf16.mxu0 0
        %757 = vmatpush2.bf16.msra.mxu0 %v702
        %758 = vmatprep.mubr.bf16.mxu0 %v567
        %759 = vmatmul.mubr.bf16.gmra.mxu0 %v566
        %v760 = vpop.f32.mrf.mxu0
        %v761 = vadd.f32 0.0, %v760
        %v762 = vpop.f32.mrf.mxu0
        %v763 = vpop.f32.mrf.mxu0
        %v764 = vadd.f32 0.0, %v763
        %v765 = vpop.f32.mrf.mxu0
        %766 = vmatprep.mubr.bf16.mxu0 %v569
        %767 = vmatmul.mubr.bf16.gmra.mxu0 %v568
        %v768 = vpop.f32.mrf.mxu0
        %v769 = vadd.f32 0.0, %v768
        %v770 = vpop.f32.mrf.mxu0
        %v771 = vpop.f32.mrf.mxu0
        %v772 = vadd.f32 0.0, %v771
        %v773 = vpop.f32.mrf.mxu0
        %774 = vmatprep.mubr.bf16.mxu0 %v571
        %775 = vmatmul.mubr.bf16.gmra.mxu0 %v570
        %v776 = vpop.f32.mrf.mxu0
        %v777 = vadd.f32 0.0, %v776
        %v778 = vpop.f32.mrf.mxu0
        %v779 = vpop.f32.mrf.mxu0
        %v780 = vadd.f32 0.0, %v779
        %v781 = vpop.f32.mrf.mxu0
        %782 = vmatprep.mubr.bf16.mxu0 %v573
        %783 = vmatmul.mubr.bf16.gmra.mxu0 %v572
        %v784 = vpop.f32.mrf.mxu0
        %v785 = vadd.f32 0.0, %v784
        %v786 = vpop.f32.mrf.mxu0
        %v787 = vpop.f32.mrf.mxu0
        %v788 = vadd.f32 0.0, %v787
        %v789 = vpop.f32.mrf.mxu0
        %790 = vmatprep.mubr.bf16.mxu0 %v575
        %791 = vmatmul.mubr.bf16.gmra.mxu0 %v574
        %v792 = vpop.f32.mrf.mxu0
        %v793 = vadd.f32 0.0, %v792
        %v794 = vpop.f32.mrf.mxu0
        %v795 = vpop.f32.mrf.mxu0
        %v796 = vadd.f32 0.0, %v795
        %v797 = vpop.f32.mrf.mxu0
        %798 = vmatprep.mubr.bf16.mxu0 %v577
        %799 = vmatmul.mubr.bf16.gmra.mxu0 %v576
        %v800 = vpop.f32.mrf.mxu0
        %v801 = vadd.f32 0.0, %v800
        %v802 = vpop.f32.mrf.mxu0
        %v803 = vpop.f32.mrf.mxu0
        %v804 = vadd.f32 0.0, %v803
        %v805 = vpop.f32.mrf.mxu0
        %806 = vmatprep.mubr.bf16.mxu0 %v579
        %807 = vmatmul.mubr.bf16.gmra.mxu0 %v578
        %v808 = vpop.f32.mrf.mxu0
        %v809 = vadd.f32 0.0, %v808
        %v810 = vpop.f32.mrf.mxu0
        %v811 = vpop.f32.mrf.mxu0
        %v812 = vadd.f32 0.0, %v811
        %v813 = vpop.f32.mrf.mxu0
        %814 = vmatprep.mubr.bf16.mxu0 %v581
        %815 = vmatmul.mubr.bf16.gmra.mxu0 %v580
        %v816 = vpop.f32.mrf.mxu0
        %v817 = vadd.f32 0.0, %v816
        %v818 = vpop.f32.mrf.mxu0
        %v819 = vpop.f32.mrf.mxu0
        %v820 = vadd.f32 0.0, %v819
        %v821 = vpop.f32.mrf.mxu0
        %822 = vmatprep.mubr.bf16.mxu0 %v583
        %823 = vmatmul.mubr.bf16.gmra.mxu0 %v582
        %v824 = vpop.f32.mrf.mxu0
        %v825 = vadd.f32 0.0, %v824
        %v826 = vpop.f32.mrf.mxu0
        %v827 = vpop.f32.mrf.mxu0
        %v828 = vadd.f32 0.0, %v827
        %v829 = vpop.f32.mrf.mxu0
        %830 = vmatprep.mubr.bf16.mxu0 %v585
        %831 = vmatmul.mubr.bf16.gmra.mxu0 %v584
        %v832 = vpop.f32.mrf.mxu0
        %v833 = vadd.f32 0.0, %v832
        %v834 = vpop.f32.mrf.mxu0
        %v835 = vpop.f32.mrf.mxu0
        %v836 = vadd.f32 0.0, %v835
        %v837 = vpop.f32.mrf.mxu0
        %838 = vmatprep.mubr.bf16.mxu0 %v587
        %839 = vmatmul.mubr.bf16.gmra.mxu0 %v586
        %v840 = vpop.f32.mrf.mxu0
        %v841 = vadd.f32 0.0, %v840
        %v842 = vpop.f32.mrf.mxu0
        %v843 = vpop.f32.mrf.mxu0
        %v844 = vadd.f32 0.0, %v843
        %v845 = vpop.f32.mrf.mxu0
        %846 = vmatprep.mubr.bf16.mxu0 %v589
        %847 = vmatmul.mubr.bf16.gmra.mxu0 %v588
        %v848 = vpop.f32.mrf.mxu0
        %v849 = vadd.f32 0.0, %v848
        %v850 = vpop.f32.mrf.mxu0
        %v851 = vpop.f32.mrf.mxu0
        %v852 = vadd.f32 0.0, %v851
        %v853 = vpop.f32.mrf.mxu0
        %854 = vmatprep.mubr.bf16.mxu0 %v591
        %855 = vmatmul.mubr.bf16.gmra.mxu0 %v590
        %v856 = vpop.f32.mrf.mxu0
        %v857 = vadd.f32 0.0, %v856
        %v858 = vpop.f32.mrf.mxu0
        %v859 = vpop.f32.mrf.mxu0
        %v860 = vadd.f32 0.0, %v859
        %v861 = vpop.f32.mrf.mxu0
        %862 = vmatprep.mubr.bf16.mxu0 %v593
        %863 = vmatmul.mubr.bf16.gmra.mxu0 %v592
        %v864 = vpop.f32.mrf.mxu0
        %v865 = vadd.f32 0.0, %v864
        %v866 = vpop.f32.mrf.mxu0
        %v867 = vpop.f32.mrf.mxu0
        %v868 = vadd.f32 0.0, %v867
        %v869 = vpop.f32.mrf.mxu0
        %870 = vmatprep.mubr.bf16.mxu0 %v595
        %871 = vmatmul.mubr.bf16.gmra.mxu0 %v594
        %v872 = vpop.f32.mrf.mxu0
        %v873 = vadd.f32 0.0, %v872
        %v874 = vpop.f32.mrf.mxu0
        %v875 = vpop.f32.mrf.mxu0
        %v876 = vadd.f32 0.0, %v875
        %v877 = vpop.f32.mrf.mxu0
        %878 = vmatprep.mubr.bf16.mxu0 %v597
        %879 = vmatmul.mubr.bf16.gmra.mxu0 %v596
        %v880 = vpop.f32.mrf.mxu0
        %v881 = vadd.f32 0.0, %v880
        %v882 = vpop.f32.mrf.mxu0
        %v883 = vpop.f32.mrf.mxu0
        %v884 = vadd.f32 0.0, %v883
        %v885 = vpop.f32.mrf.mxu0
        %886 = vdwg.mxu0
        %v887 = vpack.c.bf16 %v764, %v761
        %v888 = vpack.c.bf16 %v772, %v769
        %v889 = vpack.c.bf16 %v780, %v777
        %v890 = vpack.c.bf16 %v788, %v785
        %v891 = vpack.c.bf16 %v796, %v793
        %v892 = vpack.c.bf16 %v804, %v801
        %v893 = vpack.c.bf16 %v812, %v809
        %v894 = vpack.c.bf16 %v820, %v817
        %v895 = vpack.c.bf16 %v828, %v825
        %v896 = vpack.c.bf16 %v836, %v833
        %v897 = vpack.c.bf16 %v844, %v841
        %v898 = vpack.c.bf16 %v852, %v849
        %v899 = vpack.c.bf16 %v860, %v857
        %v900 = vpack.c.bf16 %v868, %v865
        %v901 = vpack.c.bf16 %v876, %v873
        %v902 = vpack.c.bf16 %v884, %v881
        %v919 = vunpack.c.l.b16 %v887
        %v920 = vunpack.c.h.b16 %v887
        %v921 = vunpack.c.l.b16 %v888
        %v922 = vunpack.c.h.b16 %v888
        %v923 = vunpack.c.l.b16 %v889
        %v924 = vunpack.c.h.b16 %v889
        %v925 = vunpack.c.l.b16 %v890
        %v926 = vunpack.c.h.b16 %v890
        %v927 = vunpack.c.l.b16 %v891
        %v928 = vunpack.c.h.b16 %v891
        %v929 = vunpack.c.l.b16 %v892
        %v930 = vunpack.c.h.b16 %v892
        %v931 = vunpack.c.l.b16 %v893
        %v932 = vunpack.c.h.b16 %v893
        %v933 = vunpack.c.l.b16 %v894
        %v934 = vunpack.c.h.b16 %v894
        %v935 = vunpack.c.l.b16 %v895
        %v936 = vunpack.c.h.b16 %v895
        %v937 = vunpack.c.l.b16 %v896
        %v938 = vunpack.c.h.b16 %v896
        %v939 = vunpack.c.l.b16 %v897
        %v940 = vunpack.c.h.b16 %v897
        %v941 = vunpack.c.l.b16 %v898
        %v942 = vunpack.c.h.b16 %v898
        %v943 = vunpack.c.l.b16 %v899
        %v944 = vunpack.c.h.b16 %v899
        %v945 = vunpack.c.l.b16 %v900
        %v946 = vunpack.c.h.b16 %v900
        %v947 = vunpack.c.l.b16 %v901
        %v948 = vunpack.c.h.b16 %v901
        %v949 = vunpack.c.l.b16 %v902
        %v950 = vunpack.c.h.b16 %v902
        %v951 = vpack.c.b16 %v919, %v919
        %v952 = vpack.c.b16 %v920, %v920
        %v953 = vpack.c.b16 %v921, %v921
        %v954 = vpack.c.b16 %v922, %v922
        %v955 = vpack.c.b16 %v923, %v923
        %v956 = vpack.c.b16 %v924, %v924
        %v957 = vpack.c.b16 %v925, %v925
        %v958 = vpack.c.b16 %v926, %v926
        %v959 = vpack.c.b16 %v927, %v927
        %v960 = vpack.c.b16 %v928, %v928
        %v961 = vpack.c.b16 %v929, %v929
        %v962 = vpack.c.b16 %v930, %v930
        %v963 = vpack.c.b16 %v931, %v931
        %v964 = vpack.c.b16 %v932, %v932
        %v965 = vpack.c.b16 %v933, %v933
        %v966 = vpack.c.b16 %v934, %v934
        %v967 = vpack.c.b16 %v935, %v935
        %v968 = vpack.c.b16 %v936, %v936
        %v969 = vpack.c.b16 %v937, %v937
        %v970 = vpack.c.b16 %v938, %v938
        %v971 = vpack.c.b16 %v939, %v939
        %v972 = vpack.c.b16 %v940, %v940
        %v973 = vpack.c.b16 %v941, %v941
        %v974 = vpack.c.b16 %v942, %v942
        %v975 = vpack.c.b16 %v943, %v943
        %v976 = vpack.c.b16 %v944, %v944
        %v977 = vpack.c.b16 %v945, %v945
        %v978 = vpack.c.b16 %v946, %v946
        %v979 = vpack.c.b16 %v947, %v947
        %v980 = vpack.c.b16 %v948, %v948
        %v981 = vpack.c.b16 %v949, %v949
        %v982 = vpack.c.b16 %v950, %v950
        %s1015 = smul.u32 %s397, 32
        %s1016 = sadd.s32 %s398, %s1015
        %s1017 = smul.addr %s1016, 4
        %s1018 = scalar_lea.vmem [#allocation2], %s1017
        %1019 = vst [vmem:[%s1018] sm:$0xf] %v951
        %1020 = vst [vmem:[%s1018 + $0x4] sm:$0xf] %v952
        %1021 = vst [vmem:[%s1018 + $0x8] sm:$0xf] %v953
        %1022 = vst [vmem:[%s1018 + $0xc] sm:$0xf] %v954
        %1023 = vst [vmem:[%s1018 + $0x10] sm:$0xf] %v955
        %1024 = vst [vmem:[%s1018 + $0x14] sm:$0xf] %v956
        %1025 = vst [vmem:[%s1018 + $0x18] sm:$0xf] %v957
        %1026 = vst [vmem:[%s1018 + $0x1c] sm:$0xf] %v958
        %1027 = vst [vmem:[%s1018 + $0x20] sm:$0xf] %v959
        %1028 = vst [vmem:[%s1018 + $0x24] sm:$0xf] %v960
        %1029 = vst [vmem:[%s1018 + $0x28] sm:$0xf] %v961
        %1030 = vst [vmem:[%s1018 + $0x2c] sm:$0xf] %v962
        %1031 = vst [vmem:[%s1018 + $0x30] sm:$0xf] %v963
        %1032 = vst [vmem:[%s1018 + $0x34] sm:$0xf] %v964
        %1033 = vst [vmem:[%s1018 + $0x38] sm:$0xf] %v965
        %1034 = vst [vmem:[%s1018 + $0x3c] sm:$0xf] %v966
        %1035 = vst [vmem:[%s1018 + $0x40] sm:$0xf] %v967
        %1036 = vst [vmem:[%s1018 + $0x44] sm:$0xf] %v968
        %1037 = vst [vmem:[%s1018 + $0x48] sm:$0xf] %v969
        %1038 = vst [vmem:[%s1018 + $0x4c] sm:$0xf] %v970
        %1039 = vst [vmem:[%s1018 + $0x50] sm:$0xf] %v971
        %1040 = vst [vmem:[%s1018 + $0x54] sm:$0xf] %v972
        %1041 = vst [vmem:[%s1018 + $0x58] sm:$0xf] %v973
        %1042 = vst [vmem:[%s1018 + $0x5c] sm:$0xf] %v974
        %1043 = vst [vmem:[%s1018 + $0x60] sm:$0xf] %v975
        %1044 = vst [vmem:[%s1018 + $0x64] sm:$0xf] %v976
        %1045 = vst [vmem:[%s1018 + $0x68] sm:$0xf] %v977
        %1046 = vst [vmem:[%s1018 + $0x6c] sm:$0xf] %v978
        %1047 = vst [vmem:[%s1018 + $0x70] sm:$0xf] %v979
        %1048 = vst [vmem:[%s1018 + $0x74] sm:$0xf] %v980
        %1049 = vst [vmem:[%s1018 + $0x78] sm:$0xf] %v981
        %1050 = vst [vmem:[%s1018 + $0x7c] sm:$0xf] %v982
        %s1051 = scalar_lea.vmem [#allocation3], %s177
        %v1052 = vld [vmem:[%s1051] sm:$0xff]
        %v1053 = vld [vmem:[%s1051 + $0x8] sm:$0xff]
        %v1054 = vld [vmem:[%s1051 + $0x10] sm:$0xff]
        %v1055 = vld [vmem:[%s1051 + $0x18] sm:$0xff]
        %v1056 = vld [vmem:[%s1051 + $0x20] sm:$0xff]
        %v1057 = vld [vmem:[%s1051 + $0x28] sm:$0xff]
        %v1058 = vld [vmem:[%s1051 + $0x30] sm:$0xff]
        %v1059 = vld [vmem:[%s1051 + $0x38] sm:$0xff]
        %v1060 = vld [vmem:[%s1051 + $0x40] sm:$0xff]
        %v1061 = vld [vmem:[%s1051 + $0x48] sm:$0xff]
        %v1062 = vld [vmem:[%s1051 + $0x50] sm:$0xff]
        %v1063 = vld [vmem:[%s1051 + $0x58] sm:$0xff]
        %v1064 = vld [vmem:[%s1051 + $0x60] sm:$0xff]
        %v1065 = vld [vmem:[%s1051 + $0x68] sm:$0xff]
        %v1066 = vld [vmem:[%s1051 + $0x70] sm:$0xff]
        %v1067 = vld [vmem:[%s1051 + $0x78] sm:$0xff]
        %v1068 = vld [vmem:[%s1051 + $0x80] sm:$0xff]
        %v1069 = vld [vmem:[%s1051 + $0x88] sm:$0xff]
        %v1070 = vld [vmem:[%s1051 + $0x90] sm:$0xff]
        %v1071 = vld [vmem:[%s1051 + $0x98] sm:$0xff]
        %v1072 = vld [vmem:[%s1051 + $0xa0] sm:$0xff]
        %v1073 = vld [vmem:[%s1051 + $0xa8] sm:$0xff]
        %v1074 = vld [vmem:[%s1051 + $0xb0] sm:$0xff]
        %v1075 = vld [vmem:[%s1051 + $0xb8] sm:$0xff]
        %v1076 = vld [vmem:[%s1051 + $0xc0] sm:$0xff]
        %v1077 = vld [vmem:[%s1051 + $0xc8] sm:$0xff]
        %v1078 = vld [vmem:[%s1051 + $0xd0] sm:$0xff]
        %v1079 = vld [vmem:[%s1051 + $0xd8] sm:$0xff]
        %v1080 = vld [vmem:[%s1051 + $0xe0] sm:$0xff]
        %v1081 = vld [vmem:[%s1051 + $0xe8] sm:$0xff]
        %v1082 = vld [vmem:[%s1051 + $0xf0] sm:$0xff]
        %v1083 = vld [vmem:[%s1051 + $0xf8] sm:$0xff]
        %s1084 = sadd.s32 %s27, 1
        %s1085 = sld [smem:[#allocation5 + %s1084]]
        %v1086 = vstv %s1085
        %v1087 = vmul.f32 %v1086, %v761
        %v1088 = vmul.f32 %v1086, %v764
        %v1089 = vmul.f32 %v1086, %v769
        %v1090 = vmul.f32 %v1086, %v772
        %v1091 = vmul.f32 %v1086, %v777
        %v1092 = vmul.f32 %v1086, %v780
        %v1093 = vmul.f32 %v1086, %v785
        %v1094 = vmul.f32 %v1086, %v788
        %v1095 = vmul.f32 %v1086, %v793
        %v1096 = vmul.f32 %v1086, %v796
        %v1097 = vmul.f32 %v1086, %v801
        %v1098 = vmul.f32 %v1086, %v804
        %v1099 = vmul.f32 %v1086, %v809
        %v1100 = vmul.f32 %v1086, %v812
        %v1101 = vmul.f32 %v1086, %v817
        %v1102 = vmul.f32 %v1086, %v820
        %v1103 = vmul.f32 %v1086, %v825
        %v1104 = vmul.f32 %v1086, %v828
        %v1105 = vmul.f32 %v1086, %v833
        %v1106 = vmul.f32 %v1086, %v836
        %v1107 = vmul.f32 %v1086, %v841
        %v1108 = vmul.f32 %v1086, %v844
        %v1109 = vmul.f32 %v1086, %v849
        %v1110 = vmul.f32 %v1086, %v852
        %v1111 = vmul.f32 %v1086, %v857
        %v1112 = vmul.f32 %v1086, %v860
        %v1113 = vmul.f32 %v1086, %v865
        %v1114 = vmul.f32 %v1086, %v868
        %v1115 = vmul.f32 %v1086, %v873
        %v1116 = vmul.f32 %v1086, %v876
        %v1117 = vmul.f32 %v1086, %v881
        %v1118 = vmul.f32 %v1086, %v884
        %v1119 = vadd.f32 %v1052, %v1087
        %v1120 = vadd.f32 %v1053, %v1088
        %v1121 = vadd.f32 %v1054, %v1089
        %v1122 = vadd.f32 %v1055, %v1090
        %v1123 = vadd.f32 %v1056, %v1091
        %v1124 = vadd.f32 %v1057, %v1092
        %v1125 = vadd.f32 %v1058, %v1093
        %v1126 = vadd.f32 %v1059, %v1094
        %v1127 = vadd.f32 %v1060, %v1095
        %v1128 = vadd.f32 %v1061, %v1096
        %v1129 = vadd.f32 %v1062, %v1097
        %v1130 = vadd.f32 %v1063, %v1098
        %v1131 = vadd.f32 %v1064, %v1099
        %v1132 = vadd.f32 %v1065, %v1100
        %v1133 = vadd.f32 %v1066, %v1101
        %v1134 = vadd.f32 %v1067, %v1102
        %v1135 = vadd.f32 %v1068, %v1103
        %v1136 = vadd.f32 %v1069, %v1104
        %v1137 = vadd.f32 %v1070, %v1105
        %v1138 = vadd.f32 %v1071, %v1106
        %v1139 = vadd.f32 %v1072, %v1107
        %v1140 = vadd.f32 %v1073, %v1108
        %v1141 = vadd.f32 %v1074, %v1109
        %v1142 = vadd.f32 %v1075, %v1110
        %v1143 = vadd.f32 %v1076, %v1111
        %v1144 = vadd.f32 %v1077, %v1112
        %v1145 = vadd.f32 %v1078, %v1113
        %v1146 = vadd.f32 %v1079, %v1114
        %v1147 = vadd.f32 %v1080, %v1115
        %v1148 = vadd.f32 %v1081, %v1116
        %v1149 = vadd.f32 %v1082, %v1117
        %v1150 = vadd.f32 %v1083, %v1118
        %1151 = vst [vmem:[%s1051] sm:$0xff] %v1119
        %1152 = vst [vmem:[%s1051 + $0x8] sm:$0xff] %v1120
        %1153 = vst [vmem:[%s1051 + $0x10] sm:$0xff] %v1121
        %1154 = vst [vmem:[%s1051 + $0x18] sm:$0xff] %v1122
        %1155 = vst [vmem:[%s1051 + $0x20] sm:$0xff] %v1123
        %1156 = vst [vmem:[%s1051 + $0x28] sm:$0xff] %v1124
        %1157 = vst [vmem:[%s1051 + $0x30] sm:$0xff] %v1125
        %1158 = vst [vmem:[%s1051 + $0x38] sm:$0xff] %v1126
        %1159 = vst [vmem:[%s1051 + $0x40] sm:$0xff] %v1127
        %1160 = vst [vmem:[%s1051 + $0x48] sm:$0xff] %v1128
        %1161 = vst [vmem:[%s1051 + $0x50] sm:$0xff] %v1129
        %1162 = vst [vmem:[%s1051 + $0x58] sm:$0xff] %v1130
        %1163 = vst [vmem:[%s1051 + $0x60] sm:$0xff] %v1131
        %1164 = vst [vmem:[%s1051 + $0x68] sm:$0xff] %v1132
        %1165 = vst [vmem:[%s1051 + $0x70] sm:$0xff] %v1133
        %1166 = vst [vmem:[%s1051 + $0x78] sm:$0xff] %v1134
        %1167 = vst [vmem:[%s1051 + $0x80] sm:$0xff] %v1135
        %1168 = vst [vmem:[%s1051 + $0x88] sm:$0xff] %v1136
        %1169 = vst [vmem:[%s1051 + $0x90] sm:$0xff] %v1137
        %1170 = vst [vmem:[%s1051 + $0x98] sm:$0xff] %v1138
        %1171 = vst [vmem:[%s1051 + $0xa0] sm:$0xff] %v1139
        %1172 = vst [vmem:[%s1051 + $0xa8] sm:$0xff] %v1140
        %1173 = vst [vmem:[%s1051 + $0xb0] sm:$0xff] %v1141
        %1174 = vst [vmem:[%s1051 + $0xb8] sm:$0xff] %v1142
        %1175 = vst [vmem:[%s1051 + $0xc0] sm:$0xff] %v1143
        %1176 = vst [vmem:[%s1051 + $0xc8] sm:$0xff] %v1144
        %1177 = vst [vmem:[%s1051 + $0xd0] sm:$0xff] %v1145
        %1178 = vst [vmem:[%s1051 + $0xd8] sm:$0xff] %v1146
        %1179 = vst [vmem:[%s1051 + $0xe0] sm:$0xff] %v1147
        %1180 = vst [vmem:[%s1051 + $0xe8] sm:$0xff] %v1148
        %1181 = vst [vmem:[%s1051 + $0xf0] sm:$0xff] %v1149
        %1182 = vst [vmem:[%s1051 + $0xf8] sm:$0xff] %v1150
        %p1183 = scmp.eq.s32.totalorder %s27, 9
        // Predicated region
        $region45: #{tpu_custom_call.1} parent=27 // pred_check
          %p1184 = pneg %p1183
        $region46: #{tpu_custom_call.1} parent=27 // pred_check_branch
          %1186 = sbr.rel (%p1184) target = $region48
        $region47: #{tpu_custom_call.1} parent=27 // pred_region
          %1187 = vst [vmem:[%s172] sm:$0xff] %v1119
          %1188 = vst [vmem:[%s172 + $0x8] sm:$0xff] %v1120
          %1189 = vst [vmem:[%s172 + $0x10] sm:$0xff] %v1121
          %1190 = vst [vmem:[%s172 + $0x18] sm:$0xff] %v1122
          %1191 = vst [vmem:[%s172 + $0x20] sm:$0xff] %v1123
          %1192 = vst [vmem:[%s172 + $0x28] sm:$0xff] %v1124
          %1193 = vst [vmem:[%s172 + $0x30] sm:$0xff] %v1125
          %1194 = vst [vmem:[%s172 + $0x38] sm:$0xff] %v1126
          %1195 = vst [vmem:[%s172 + $0x40] sm:$0xff] %v1127
          %1196 = vst [vmem:[%s172 + $0x48] sm:$0xff] %v1128
          %1197 = vst [vmem:[%s172 + $0x50] sm:$0xff] %v1129
          %1198 = vst [vmem:[%s172 + $0x58] sm:$0xff] %v1130
          %1199 = vst [vmem:[%s172 + $0x60] sm:$0xff] %v1131
          %1200 = vst [vmem:[%s172 + $0x68] sm:$0xff] %v1132
          %1201 = vst [vmem:[%s172 + $0x70] sm:$0xff] %v1133
          %1202 = vst [vmem:[%s172 + $0x78] sm:$0xff] %v1134
          %1203 = vst [vmem:[%s172 + $0x80] sm:$0xff] %v1135
          %1204 = vst [vmem:[%s172 + $0x88] sm:$0xff] %v1136
          %1205 = vst [vmem:[%s172 + $0x90] sm:$0xff] %v1137
          %1206 = vst [vmem:[%s172 + $0x98] sm:$0xff] %v1138
          %1207 = vst [vmem:[%s172 + $0xa0] sm:$0xff] %v1139
          %1208 = vst [vmem:[%s172 + $0xa8] sm:$0xff] %v1140
          %1209 = vst [vmem:[%s172 + $0xb0] sm:$0xff] %v1141
          %1210 = vst [vmem:[%s172 + $0xb8] sm:$0xff] %v1142
          %1211 = vst [vmem:[%s172 + $0xc0] sm:$0xff] %v1143
          %1212 = vst [vmem:[%s172 + $0xc8] sm:$0xff] %v1144
          %1213 = vst [vmem:[%s172 + $0xd0] sm:$0xff] %v1145
          %1214 = vst [vmem:[%s172 + $0xd8] sm:$0xff] %v1146
          %1215 = vst [vmem:[%s172 + $0xe0] sm:$0xff] %v1147
          %1216 = vst [vmem:[%s172 + $0xe8] sm:$0xff] %v1148
          %1217 = vst [vmem:[%s172 + $0xf0] sm:$0xff] %v1149
          %1218 = vst [vmem:[%s172 + $0xf8] sm:$0xff] %v1150
        $region48: #{tpu_custom_call.1} parent=27 // pred_fallthru
          _
        %s1219 = sand.u32 %s89, 1
        %s1220 = scalar_lea.sflag [#allocation8], %s1219
        %s1221 = sand.u32 %s89, 1
        %s1222 = smul.addr %s1221, 256
        %s1223 = scalar_lea.vmem [#allocation11], %s1222
        // Predicated region
        $region49: #{tpu_custom_call.1} parent=27 // pred_check
          %p1224 = pneg %p99
        $region50: #{tpu_custom_call.1} parent=27 // pred_check_branch
          %1226 = sbr.rel (%p1224) target = $region52
        $region51: #{tpu_custom_call.1} parent=27 // pred_region
          %p1227 = scmp.eq.s32.totalorder %s27, 9
          %s1228 = scalar_select %p1227, %s28, 0
          %s1229 = smul.u32 32, %s1228
          %s1231 = ssub.s32 4096, 4096
          %1232 = vsyncadd %s1220, %s1231
          %s1233 = smul.addr %s1229, 128
          %s1234 = scalar_lea.hbm %s3, %s1233
          %s1235 = sshll.u32 %s1223, 4
          %s1236 = int_to_ptr.vmem [resolvable:$true] %s1235
          %1241 = dma.vmem_to_hbm [thread:$0]  %s1236, 4096, %s1234, %s1220, 128, 128, 8
        $region52: #{tpu_custom_call.1} parent=27 // pred_fallthru
          _
      $region28: #{tpu_custom_call.1} parent=5 // pred_fallthru
        _
      %p1242 = scmp.le.s32.totalorder 2, %s18
      // Predicated region
      $region53: #{tpu_custom_call.1} parent=5 // pred_check
        %p1243 = pneg %p1242
      $region54: #{tpu_custom_call.1} parent=5 // pred_check_branch
        %1245 = sbr.rel (%p1243) target = $region56
      $region55: #{tpu_custom_call.1} parent=5 // pred_region
        %s1246 = ssub.s32 %s18, 2
        // Predicated region
        $region57: #{tpu_custom_call.1} parent=55 // pred_check
          %p1247 = pneg %p105
        $region58: #{tpu_custom_call.1} parent=55 // pred_check_branch
          %1249 = sbr.rel (%p1247) target = $region60
        $region59: #{tpu_custom_call.1} parent=55 // pred_region
          %s1250 = sand.u32 %s90, 1
          %s1251 = scalar_lea.sflag [#allocation8], %s1250
          %s1252 = sand.u32 %s90, 1
          %s1253 = smul.addr %s1252, 256
          %s1254 = scalar_lea.vmem [#allocation11], %s1253
          %1255 = dma.done %s1251, 4096
        $region60: #{tpu_custom_call.1} parent=55 // pred_fallthru
          _
      $region56: #{tpu_custom_call.1} parent=5 // pred_fallthru
        _
    $region6: #{tpu_custom_call.1} parent=1 // loop_footer
      %s22 = sadd.s32 1, %s18
    $region7: #{tpu_custom_call.1} parent=1 // loop_footer_branch
      %17 = sbr.rel target = $region3
    $region8: #{tpu_custom_call.1} parent=1 // loop_exit
      _
    %1256 = vsyncpa [#allocation7], 1
    %s1257 = scalar_lea.sflag [#allocation7], 1
    %1258 = vsyncpa %s1257, 1
    %1259 = vsyncpa [#allocation10], 1
    %1260 = vsyncpa [#allocation8], 1
    %s1261 = scalar_lea.sflag [#allocation8], 1
    %1262 = vsyncpa %s1261, 1

// kernel: tpu_custom_call.1
$region0: #{tpu_custom_call.1}
  #allocation0 [shape = 'u32[]', space=smem, size = 0x4, offset = 0x4, fixed_abs, tag = 'smem constant byte address 0x4 - core index']
  #allocation1 [shape = 'u32[144,128]{1,0:T(1,128)}', space=vmem, size = 0x12000, scoped, tag = 'internal scratch']
  #allocation2 [shape = 'bf16[2,256,128]{2,1,0:T(8,128)(2,1)}', space=vmem, size = 0x20000, scoped, tag = 'scratch operand']
  #allocation3 [shape = 'f32[256,128]{1,0:T(8,128)}', space=vmem, size = 0x20000, scoped, tag = 'scratch operand']
  #allocation4 [shape = 's32[1]{0}', space=sflag, size = 0x4, scoped, tag = 'scoped memory for tpu_custom_call.1']
  #allocation5 [shape = 'u8[512]{0}', space=smem, size = 0x200, scoped, tag = 'prefetched SMEM operand 0']
  %s0 = inlined_call_operand.hbm [shape: f32[11], index: 0, kind: input, shape index: {}]
  %s1 = inlined_call_operand.hbm [shape: bf16[256,128], index: 1, kind: input, shape index: {}]
  %s2 = inlined_call_operand.hbm [shape: bf16[256,256], index: 2, kind: input, shape index: {}]
  %s3 = inlined_call_operand.hbm [shape: f32[256,128], index: 3, kind: output, shape index: {}]
  %s4 = sld [smem:[#allocation0]]
  $region61: #{tpu_custom_call.1} parent=0
    _
  %s6 = ssub.s32 1, %s4
  %s7 = scalar_select 0, %s6, %s4
  %9 = dma.hbm_to_smem %s0, 16, [#allocation5], [#allocation4]
  %10 = dma.done [#allocation4], 16
  %11 = sfence
  $region1: #{tpu_custom_call.1} parent=0
    #allocation6 [shape = 'u8[65536]{0}', space=vmem, size = 0x10000, scoped, tag = 'input window, operand 1, single buffered']
    #allocation7 [shape = 's32[2]{0}', space=sflag, size = 0x8, scoped, tag = 'scoped memory for tpu_custom_call.1']
    #allocation8 [shape = 's32[2]{0}', space=sflag, size = 0x8, scoped, tag = 'scoped memory for tpu_custom_call.1']
    #allocation9 [shape = 'u8[131072]{0}', space=vmem, size = 0x20000, scoped, tag = 'input window, operand 2, single buffered']
    #allocation10 [shape = 's32[1]{0}', space=sflag, size = 0x4, scoped, tag = 'scoped memory for tpu_custom_call.1']
    #allocation11 [shape = 'u8[262144]{0}', space=vmem, size = 0x40000, scoped, tag = 'output window, operand 0']
    %12 = vsyncpa [#allocation7], 0
    %13 = vsyncpa [#allocation10], 0
    %14 = vsyncpa [#allocation8], 0
    %s15 = scalar_lea.sflag [#allocation8], 1
    %16 = vsyncpa %s15, 0
    loop: start=0, step=1, limit=12
    $region2: #{tpu_custom_call.1} parent=1 // loop_pre_header
      _
    $region3: #{tpu_custom_call.1} parent=1 // loop_header
      %s18 = sphi 0, %s22
      %p19 = scmp.ge.s32.totalorder %s18, 12
      %s25 = sphi 0, %s37
      %s26 = sphi 0, %s33
      %s27 = sphi 0, %s25
      %s28 = sphi 0, %s26
      %s29 = sphi 0, %s27
      %s30 = sphi 0, %s28
      %s38 = sphi 0, %s38
      %s40 = sphi 0, %s38
      %s41 = sphi 0, %s40
      %s55 = sphi 0, %s41
      %s59 = sphi 0, %s59
      %s61 = sphi 0, %s59
      %s62 = sphi 0, %s61
      %s76 = sphi 0, %s62
      %s86 = sphi 0, %s88
      %s89 = sphi 0, %s86
      %s90 = sphi 0, %s89
      %s106 = sphi 0, %s90
    $region4: #{tpu_custom_call.1} parent=1 // loop_header_branch
      %21 = sbr.rel (%p19) target = $region8
    $region5: #{tpu_custom_call.1} parent=1 // loop_body
      %s23 = ssub.s32 %s18, 1
      %s24 = ssub.s32 %s18, 2
      %s31 = sadd.s32 1, %s26
      %p32 = scmp.ge.s32.totalorder %s31, 1
      %s33 = scalar_select %p32, 0, %s31
      %s34 = sadd.s32 1, %s25
      %s35 = scalar_select %p32, %s34, %s25
      %p36 = scmp.ge.s32.totalorder %s35, 10
      %s37 = scalar_select %p36, 0, %s35
      %s39 = sadd.s32 %s38, 1
      %p42 = scmp.eq.s32.totalorder %s18, 9
      %p43 = scmp.ne.s32.totalorder %s38, %s40
      %p44 = scmp.eq.s32.totalorder %s18, 0
      %p45 = por %p43, %p44
      %p46 = scmp.ne.s32.totalorder %s38, %s40
      %p47 = scmp.eq.s32.totalorder %s23, 9
      %p48 = por %p46, %p47
      %p49 = scmp.ne.s32.totalorder %s40, %s41
      %p50 = scmp.eq.s32.totalorder %s23, 0
      %p51 = por %p49, %p50
      %p52 = scmp.ne.s32.totalorder %s40, %s41
      %p53 = scmp.eq.s32.totalorder %s24, 9
      %p54 = por %p52, %p53
      %p56 = scmp.ne.s32.totalorder %s41, %s55
      %p57 = scmp.eq.s32.totalorder %s24, 0
      %p58 = por %p56, %p57
      %s60 = sadd.s32 %s59, 1
      %p63 = scmp.eq.s32.totalorder %s18, 9
      %p64 = scmp.ne.s32.totalorder %s59, %s61
      %p65 = scmp.eq.s32.totalorder %s18, 0
      %p66 = por %p64, %p65
      %p67 = scmp.ne.s32.totalorder %s59, %s61
      %p68 = scmp.eq.s32.totalorder %s23, 9
      %p69 = por %p67, %p68
      %p70 = scmp.ne.s32.totalorder %s61, %s62
      %p71 = scmp.eq.s32.totalorder %s23, 0
      %p72 = por %p70, %p71
      %p73 = scmp.ne.s32.totalorder %s61, %s62
      %p74 = scmp.eq.s32.totalorder %s24, 9
      %p75 = por %p73, %p74
      %p77 = scmp.ne.s32.totalorder %s62, %s76
      %p78 = scmp.eq.s32.totalorder %s24, 0
      %p79 = por %p77, %p78
      %p80 = scmp.eq.s32.totalorder %s25, 9
      %s81 = scalar_select %p80, %s26, 0
      %p82 = scmp.eq.s32.totalorder %s37, 9
      %s83 = scalar_select %p82, %s33, 0
      %s84 = ssub.s32 %s81, %s83
      %p85 = scmp.eq.s32.totalorder %s84, 0
      %s87 = sadd.s32 %s86, 1
      %s88 = scalar_select %p85, %s86, %s87
      %p91 = pneg %p85
      %p92 = scmp.eq.s32.totalorder %s18, 9
      %p93 = por %p91, %p92
      %p94 = scmp.ne.s32.totalorder %s86, %s89
      %p95 = scmp.eq.s32.totalorder %s18, 0
      %p96 = por %p94, %p95
      %p97 = scmp.ne.s32.totalorder %s86, %s89
      %p98 = scmp.eq.s32.totalorder %s23, 9
      %p99 = por %p97, %p98
      %p100 = scmp.ne.s32.totalorder %s89, %s90
      %p101 = scmp.eq.s32.totalorder %s23, 0
      %p102 = por %p100, %p101
      %p103 = scmp.ne.s32.totalorder %s89, %s90
      %p104 = scmp.eq.s32.totalorder %s24, 9
      %p105 = por %p103, %p104
      %p107 = scmp.ne.s32.totalorder %s90, %s106
      %p108 = scmp.eq.s32.totalorder %s24, 0
      %p109 = por %p107, %p108
      %p110 = scmp.le.s32.totalorder 1, %s18
      %p111 = scmp.lt.s32.totalorder %s18, 11
      %p112 = pnand %p110, %p111
      %p113 = pneg %p112
      // Predicated region
      $region9: #{tpu_custom_call.1} parent=5 // pred_check
        _
      $region10: #{tpu_custom_call.1} parent=5 // pred_check_branch
        %115 = sbr.rel (%p112) target = $region12
      $region11: #{tpu_custom_call.1} parent=5 // pred_region
        %s116 = ssub.s32 %s18, 1
        // Predicated region
        $region13: #{tpu_custom_call.1} parent=11 // pred_check
          %p117 = pneg %p51
        $region14: #{tpu_custom_call.1} parent=11 // pred_check_branch
          %119 = sbr.rel (%p117) target = $region16
        $region15: #{tpu_custom_call.1} parent=11 // pred_region
          %s121 = ssub.s32 2048, 2048
          %122 = vsyncadd [#allocation7], %s121
          %s123 = sshll.u32 [#allocation6], 4
          %s124 = int_to_ptr.vmem [resolvable:$true] %s123
          %129 = dma.hbm_to_vmem [thread:$0]  %s1, 2048, %s124, [#allocation7], 64, 64, 4
        $region16: #{tpu_custom_call.1} parent=11 // pred_fallthru
          _
        // Predicated region
        $region17: #{tpu_custom_call.1} parent=11 // pred_check
          %p130 = pneg %p72
        $region18: #{tpu_custom_call.1} parent=11 // pred_check_branch
          %132 = sbr.rel (%p130) target = $region20
        $region19: #{tpu_custom_call.1} parent=11 // pred_region
          %s134 = ssub.s32 4096, 4096
          %135 = vsyncadd [#allocation10], %s134
          %s136 = sshll.u32 [#allocation9], 4
          %s137 = int_to_ptr.vmem [resolvable:$true] %s136
          %142 = dma.hbm_to_vmem [thread:$0]  %s2, 4096, %s137, [#allocation10], 128, 128, 8
        $region20: #{tpu_custom_call.1} parent=11 // pred_fallthru
          _
      $region12: #{tpu_custom_call.1} parent=5 // pred_fallthru
        _
      %p143 = scmp.lt.s32.totalorder %s18, 10
      // Predicated region
      $region21: #{tpu_custom_call.1} parent=5 // pred_check
        %p144 = pneg %p143
      $region22: #{tpu_custom_call.1} parent=5 // pred_check_branch
        %146 = sbr.rel (%p144) target = $region24
      $region23: #{tpu_custom_call.1} parent=5 // pred_region
        _
      $region24: #{tpu_custom_call.1} parent=5 // pred_fallthru
        _
      %p147 = scmp.le.s32.totalorder 1, %s18
      %p148 = scmp.lt.s32.totalorder %s18, 11
      %p149 = pnand %p147, %p148
      %p150 = pneg %p149
      // Predicated region
      $region25: #{tpu_custom_call.1} parent=5 // pred_check
        _
      $region26: #{tpu_custom_call.1} parent=5 // pred_check_branch
        %152 = sbr.rel (%p149) target = $region28
      $region27: #{tpu_custom_call.1} parent=5 // pred_region
        %s153 = ssub.s32 %s18, 1
        // Predicated region
        $region29: #{tpu_custom_call.1} parent=27 // pred_check
          %p154 = pneg %p51
        $region30: #{tpu_custom_call.1} parent=27 // pred_check_branch
          %156 = sbr.rel (%p154) target = $region32
        $region31: #{tpu_custom_call.1} parent=27 // pred_region
          %157 = dma.done [#allocation7], 2048
        $region32: #{tpu_custom_call.1} parent=27 // pred_fallthru
          _
        // Predicated region
        $region33: #{tpu_custom_call.1} parent=27 // pred_check
          %p158 = pneg %p72
        $region34: #{tpu_custom_call.1} parent=27 // pred_check_branch
          %160 = sbr.rel (%p158) target = $region36
        $region35: #{tpu_custom_call.1} parent=27 // pred_region
          %161 = dma.done [#allocation10], 4096
        $region36: #{tpu_custom_call.1} parent=27 // pred_fallthru
          _
        %p162 = pneg %p51
        %p163 = pneg %p48
        %p164 = pneg %p72
        %p165 = pneg %p69
        %p166 = pneg %p102
        %p167 = pneg %p99
        %s168 = sand.u32 %s89, 1
        %s169 = scalar_lea.sflag [#allocation8], %s168
        %s170 = sand.u32 %s89, 1
        %s171 = smul.addr %s170, 256
        %s172 = scalar_lea.vmem [#allocation11], %s171
        %p173 = scmp.eq.s32.totalorder %s27, 9
        %s174 = scalar_select %p173, %s28, 0
        %s175 = smul.u32 32, %s174
        %s177 = smul.u32 %s28, 256
        %p178 = scmp.eq.s32.totalorder %s27, 0
        // Predicated region
        $region37: #{tpu_custom_call.1} parent=27 // pred_check
          %p179 = pneg %p178
        $region38: #{tpu_custom_call.1} parent=27 // pred_check_branch
          %181 = sbr.rel (%p179) target = $region40
        $region39: #{tpu_custom_call.1} parent=27 // pred_region
          %p182 = scmp.eq.s32.totalorder %s28, 0
          // Predicated region
          $region41: #{tpu_custom_call.1} parent=39 // pred_check
            %p183 = pneg %p182
          $region42: #{tpu_custom_call.1} parent=39 // pred_check_branch
            %185 = sbr.rel (%p183) target = $region44
          $region43: #{tpu_custom_call.1} parent=39 // pred_region
            %v186 = vld [vmem:[#allocation6] sm:$0xf]
            %v187 = vld [vmem:[#allocation6 + $0x4] sm:$0xf]
            %v188 = vld [vmem:[#allocation6 + $0x8] sm:$0xf]
            %v189 = vld [vmem:[#allocation6 + $0xc] sm:$0xf]
            %v190 = vld [vmem:[#allocation6 + $0x10] sm:$0xf]
            %v191 = vld [vmem:[#allocation6 + $0x14] sm:$0xf]
            %v192 = vld [vmem:[#allocation6 + $0x18] sm:$0xf]
            %v193 = vld [vmem:[#allocation6 + $0x1c] sm:$0xf]
            %v194 = vld [vmem:[#allocation6 + $0x20] sm:$0xf]
            %v195 = vld [vmem:[#allocation6 + $0x24] sm:$0xf]
            %v196 = vld [vmem:[#allocation6 + $0x28] sm:$0xf]
            %v197 = vld [vmem:[#allocation6 + $0x2c] sm:$0xf]
            %v198 = vld [vmem:[#allocation6 + $0x30] sm:$0xf]
            %v199 = vld [vmem:[#allocation6 + $0x34] sm:$0xf]
            %v200 = vld [vmem:[#allocation6 + $0x38] sm:$0xf]
            %v201 = vld [vmem:[#allocation6 + $0x3c] sm:$0xf]
            %v202 = vld [vmem:[#allocation6 + $0x40] sm:$0xf]
            %v203 = vld [vmem:[#allocation6 + $0x44] sm:$0xf]
            %v204 = vld [vmem:[#allocation6 + $0x48] sm:$0xf]
            %v205 = vld [vmem:[#allocation6 + $0x4c] sm:$0xf]
            %v206 = vld [vmem:[#allocation6 + $0x50] sm:$0xf]
            %v207 = vld [vmem:[#allocation6 + $0x54] sm:$0xf]
            %v208 = vld [vmem:[#allocation6 + $0x58] sm:$0xf]
            %v209 = vld [vmem:[#allocation6 + $0x5c] sm:$0xf]
            %v210 = vld [vmem:[#allocation6 + $0x60] sm:$0xf]
            %v211 = vld [vmem:[#allocation6 + $0x64] sm:$0xf]
            %v212 = vld [vmem:[#allocation6 + $0x68] sm:$0xf]
            %v213 = vld [vmem:[#allocation6 + $0x6c] sm:$0xf]
            %v214 = vld [vmem:[#allocation6 + $0x70] sm:$0xf]
            %v215 = vld [vmem:[#allocation6 + $0x74] sm:$0xf]
            %v216 = vld [vmem:[#allocation6 + $0x78] sm:$0xf]
            %v217 = vld [vmem:[#allocation6 + $0x7c] sm:$0xf]
            %218 = vst [vmem:[#allocation2] sm:$0xf] %v186
            %219 = vst [vmem:[#allocation2 + $0x4] sm:$0xf] %v187
            %220 = vst [vmem:[#allocation2 + $0x8] sm:$0xf] %v188
            %221 = vst [vmem:[#allocation2 + $0xc] sm:$0xf] %v189
            %222 = vst [vmem:[#allocation2 + $0x10] sm:$0xf] %v190
            %223 = vst [vmem:[#allocation2 + $0x14] sm:$0xf] %v191
            %224 = vst [vmem:[#allocation2 + $0x18] sm:$0xf] %v192
            %225 = vst [vmem:[#allocation2 + $0x1c] sm:$0xf] %v193
            %226 = vst [vmem:[#allocation2 + $0x20] sm:$0xf] %v194
            %227 = vst [vmem:[#allocation2 + $0x24] sm:$0xf] %v195
            %228 = vst [vmem:[#allocation2 + $0x28] sm:$0xf] %v196
            %229 = vst [vmem:[#allocation2 + $0x2c] sm:$0xf] %v197
            %230 = vst [vmem:[#allocation2 + $0x30] sm:$0xf] %v198
            %231 = vst [vmem:[#allocation2 + $0x34] sm:$0xf] %v199
            %232 = vst [vmem:[#allocation2 + $0x38] sm:$0xf] %v200
            %233 = vst [vmem:[#allocation2 + $0x3c] sm:$0xf] %v201
            %234 = vst [vmem:[#allocation2 + $0x40] sm:$0xf] %v202
            %235 = vst [vmem:[#allocation2 + $0x44] sm:$0xf] %v203
            %236 = vst [vmem:[#allocation2 + $0x48] sm:$0xf] %v204
            %237 = vst [vmem:[#allocation2 + $0x4c] sm:$0xf] %v205
            %238 = vst [vmem:[#allocation2 + $0x50] sm:$0xf] %v206
            %239 = vst [vmem:[#allocation2 + $0x54] sm:$0xf] %v207
            %240 = vst [vmem:[#allocation2 + $0x58] sm:$0xf] %v208
            %241 = vst [vmem:[#allocation2 + $0x5c] sm:$0xf] %v209
            %242 = vst [vmem:[#allocation2 + $0x60] sm:$0xf] %v210
            %243 = vst [vmem:[#allocation2 + $0x64] sm:$0xf] %v211
            %244 = vst [vmem:[#allocation2 + $0x68] sm:$0xf] %v212
            %245 = vst [vmem:[#allocation2 + $0x6c] sm:$0xf] %v213
            %246 = vst [vmem:[#allocation2 + $0x70] sm:$0xf] %v214
            %247 = vst [vmem:[#allocation2 + $0x74] sm:$0xf] %v215
            %248 = vst [vmem:[#allocation2 + $0x78] sm:$0xf] %v216
            %249 = vst [vmem:[#allocation2 + $0x7c] sm:$0xf] %v217
          $region44: #{tpu_custom_call.1} parent=39 // pred_fallthru
            _
          %s250 = sld [smem:[#allocation5]]
          %s251 = sshra.s32 %s177, 3
          %s252 = sand.u32 %s177, 7
          %s253 = smul.addr %s251, 4
          %s254 = scalar_lea.vmem [#allocation6], %s253
          %v255 = vld [vmem:[%s254] sm:$0xf]
          %v256 = vld [vmem:[%s254 + $0x4] sm:$0xf]
          %v257 = vld [vmem:[%s254 + $0x8] sm:$0xf]
          %v258 = vld [vmem:[%s254 + $0xc] sm:$0xf]
          %v259 = vld [vmem:[%s254 + $0x10] sm:$0xf]
          %v260 = vld [vmem:[%s254 + $0x14] sm:$0xf]
          %v261 = vld [vmem:[%s254 + $0x18] sm:$0xf]
          %v262 = vld [vmem:[%s254 + $0x1c] sm:$0xf]
          %v263 = vld [vmem:[%s254 + $0x20] sm:$0xf]
          %v264 = vld [vmem:[%s254 + $0x24] sm:$0xf]
          %v265 = vld [vmem:[%s254 + $0x28] sm:$0xf]
          %v266 = vld [vmem:[%s254 + $0x2c] sm:$0xf]
          %v267 = vld [vmem:[%s254 + $0x30] sm:$0xf]
          %v268 = vld [vmem:[%s254 + $0x34] sm:$0xf]
          %v269 = vld [vmem:[%s254 + $0x38] sm:$0xf]
          %v270 = vld [vmem:[%s254 + $0x3c] sm:$0xf]
          %v271 = vld [vmem:[%s254 + $0x40] sm:$0xf]
          %v272 = vld [vmem:[%s254 + $0x44] sm:$0xf]
          %v273 = vld [vmem:[%s254 + $0x48] sm:$0xf]
          %v274 = vld [vmem:[%s254 + $0x4c] sm:$0xf]
          %v275 = vld [vmem:[%s254 + $0x50] sm:$0xf]
          %v276 = vld [vmem:[%s254 + $0x54] sm:$0xf]
          %v277 = vld [vmem:[%s254 + $0x58] sm:$0xf]
          %v278 = vld [vmem:[%s254 + $0x5c] sm:$0xf]
          %v279 = vld [vmem:[%s254 + $0x60] sm:$0xf]
          %v280 = vld [vmem:[%s254 + $0x64] sm:$0xf]
          %v281 = vld [vmem:[%s254 + $0x68] sm:$0xf]
          %v282 = vld [vmem:[%s254 + $0x6c] sm:$0xf]
          %v283 = vld [vmem:[%s254 + $0x70] sm:$0xf]
          %v284 = vld [vmem:[%s254 + $0x74] sm:$0xf]
          %v285 = vld [vmem:[%s254 + $0x78] sm:$0xf]
          %v286 = vld [vmem:[%s254 + $0x7c] sm:$0xf]
          %v287 = vunpack.c.l.bf16 %v255
          %v288 = vunpack.c.l.bf16 %v256
          %v289 = vunpack.c.l.bf16 %v257
          %v290 = vunpack.c.l.bf16 %v258
          %v291 = vunpack.c.l.bf16 %v259
          %v292 = vunpack.c.l.bf16 %v260
          %v293 = vunpack.c.l.bf16 %v261
          %v294 = vunpack.c.l.bf16 %v262
          %v295 = vunpack.c.l.bf16 %v263
          %v296 = vunpack.c.l.bf16 %v264
          %v297 = vunpack.c.l.bf16 %v265
          %v298 = vunpack.c.l.bf16 %v266
          %v299 = vunpack.c.l.bf16 %v267
          %v300 = vunpack.c.l.bf16 %v268
          %v301 = vunpack.c.l.bf16 %v269
          %v302 = vunpack.c.l.bf16 %v270
          %v303 = vunpack.c.l.bf16 %v271
          %v304 = vunpack.c.l.bf16 %v272
          %v305 = vunpack.c.l.bf16 %v273
          %v306 = vunpack.c.l.bf16 %v274
          %v307 = vunpack.c.l.bf16 %v275
          %v308 = vunpack.c.l.bf16 %v276
          %v309 = vunpack.c.l.bf16 %v277
          %v310 = vunpack.c.l.bf16 %v278
          %v311 = vunpack.c.l.bf16 %v279
          %v312 = vunpack.c.l.bf16 %v280
          %v313 = vunpack.c.l.bf16 %v281
          %v314 = vunpack.c.l.bf16 %v282
          %v315 = vunpack.c.l.bf16 %v283
          %v316 = vunpack.c.l.bf16 %v284
          %v317 = vunpack.c.l.bf16 %v285
          %v318 = vunpack.c.l.bf16 %v286
          %v319 = vstv %s250
          %v320 = vmul.f32 %v319, %v287
          %v321 = vmul.f32 %v319, %v288
          %v322 = vmul.f32 %v319, %v289
          %v323 = vmul.f32 %v319, %v290
          %v324 = vmul.f32 %v319, %v291
          %v325 = vmul.f32 %v319, %v292
          %v326 = vmul.f32 %v319, %v293
          %v327 = vmul.f32 %v319, %v294
          %v328 = vmul.f32 %v319, %v295
          %v329 = vmul.f32 %v319, %v296
          %v330 = vmul.f32 %v319, %v297
          %v331 = vmul.f32 %v319, %v298
          %v332 = vmul.f32 %v319, %v299
          %v333 = vmul.f32 %v319, %v300
          %v334 = vmul.f32 %v319, %v301
          %v335 = vmul.f32 %v319, %v302
          %v336 = vmul.f32 %v319, %v303
          %v337 = vmul.f32 %v319, %v304
          %v338 = vmul.f32 %v319, %v305
          %v339 = vmul.f32 %v319, %v306
          %v340 = vmul.f32 %v319, %v307
          %v341 = vmul.f32 %v319, %v308
          %v342 = vmul.f32 %v319, %v309
          %v343 = vmul.f32 %v319, %v310
          %v344 = vmul.f32 %v319, %v311
          %v345 = vmul.f32 %v319, %v312
          %v346 = vmul.f32 %v319, %v313
          %v347 = vmul.f32 %v319, %v314
          %v348 = vmul.f32 %v319, %v315
          %v349 = vmul.f32 %v319, %v316
          %v350 = vmul.f32 %v319, %v317
          %v351 = vmul.f32 %v319, %v318
          %s352 = scalar_lea.vmem [#allocation3], %s177
          %353 = vst [vmem:[%s352] sm:$0xff] %v320
          %354 = vst [vmem:[%s352 + $0x8] sm:$0xff] %v321
          %355 = vst [vmem:[%s352 + $0x10] sm:$0xff] %v322
          %356 = vst [vmem:[%s352 + $0x18] sm:$0xff] %v323
          %357 = vst [vmem:[%s352 + $0x20] sm:$0xff] %v324
          %358 = vst [vmem:[%s352 + $0x28] sm:$0xff] %v325
          %359 = vst [vmem:[%s352 + $0x30] sm:$0xff] %v326
          %360 = vst [vmem:[%s352 + $0x38] sm:$0xff] %v327
          %361 = vst [vmem:[%s352 + $0x40] sm:$0xff] %v328
          %362 = vst [vmem:[%s352 + $0x48] sm:$0xff] %v329
          %363 = vst [vmem:[%s352 + $0x50] sm:$0xff] %v330
          %364 = vst [vmem:[%s352 + $0x58] sm:$0xff] %v331
          %365 = vst [vmem:[%s352 + $0x60] sm:$0xff] %v332
          %366 = vst [vmem:[%s352 + $0x68] sm:$0xff] %v333
          %367 = vst [vmem:[%s352 + $0x70] sm:$0xff] %v334
          %368 = vst [vmem:[%s352 + $0x78] sm:$0xff] %v335
          %369 = vst [vmem:[%s352 + $0x80] sm:$0xff] %v336
          %370 = vst [vmem:[%s352 + $0x88] sm:$0xff] %v337
          %371 = vst [vmem:[%s352 + $0x90] sm:$0xff] %v338
          %372 = vst [vmem:[%s352 + $0x98] sm:$0xff] %v339
          %373 = vst [vmem:[%s352 + $0xa0] sm:$0xff] %v340
          %374 = vst [vmem:[%s352 + $0xa8] sm:$0xff] %v341
          %375 = vst [vmem:[%s352 + $0xb0] sm:$0xff] %v342
          %376 = vst [vmem:[%s352 + $0xb8] sm:$0xff] %v343
          %377 = vst [vmem:[%s352 + $0xc0] sm:$0xff] %v344
          %378 = vst [vmem:[%s352 + $0xc8] sm:$0xff] %v345
          %379 = vst [vmem:[%s352 + $0xd0] sm:$0xff] %v346
          %380 = vst [vmem:[%s352 + $0xd8] sm:$0xff] %v347
          %381 = vst [vmem:[%s352 + $0xe0] sm:$0xff] %v348
          %382 = vst [vmem:[%s352 + $0xe8] sm:$0xff] %v349
          %383 = vst [vmem:[%s352 + $0xf0] sm:$0xff] %v350
          %384 = vst [vmem:[%s352 + $0xf8] sm:$0xff] %v351
        $region40: #{tpu_custom_call.1} parent=27 // pred_fallthru
          _
        %p385 = scmp.lt.s32.totalorder %s27, 0
        %s386 = ssub.s32 0, %s27
        %s387 = scalar_select %p385, %s386, %s27
        %s388 = sand.u32 %s387, 1
        %s389 = ssub.s32 0, %s388
        %s390 = scalar_select %p385, %s389, %s388
        %p391 = scmp.ne.s32.totalorder %s390, 0
        %p392 = scmp.lt.s32.totalorder %s390, 0
        %p393 = pnand %p392, %p391
        %p394 = pneg %p393
        %s395 = sadd.s32 %s390, 2
        %s396 = scalar_select %p394, %s395, %s390
        %s397 = ssub.s32 1, %s396
        %s398 = sshra.s32 %s177, 3
        %s399 = sand.u32 %s177, 7
        %s400 = smul.u32 %s398, 2
        %s401 = smul.addr %s400, 4
        %s402 = scalar_lea.vmem [#allocation9], %s401
        %v403 = vld [vmem:[%s402] sm:$0xff]
        %v404 = vld [vmem:[%s402 + $0x8] sm:$0xff]
        %v405 = vld [vmem:[%s402 + $0x10] sm:$0xff]
        %v406 = vld [vmem:[%s402 + $0x18] sm:$0xff]
        %v407 = vld [vmem:[%s402 + $0x20] sm:$0xff]
        %v408 = vld [vmem:[%s402 + $0x28] sm:$0xff]
        %v409 = vld [vmem:[%s402 + $0x30] sm:$0xff]
        %v410 = vld [vmem:[%s402 + $0x38] sm:$0xff]
        %v411 = vld [vmem:[%s402 + $0x40] sm:$0xff]
        %v412 = vld [vmem:[%s402 + $0x48] sm:$0xff]
        %v413 = vld [vmem:[%s402 + $0x50] sm:$0xff]
        %v414 = vld [vmem:[%s402 + $0x58] sm:$0xff]
        %v415 = vld [vmem:[%s402 + $0x60] sm:$0xff]
        %v416 = vld [vmem:[%s402 + $0x68] sm:$0xff]
        %v417 = vld [vmem:[%s402 + $0x70] sm:$0xff]
        %v418 = vld [vmem:[%s402 + $0x78] sm:$0xff]
        %v419 = vld [vmem:[%s402 + $0x80] sm:$0xff]
        %v420 = vld [vmem:[%s402 + $0x88] sm:$0xff]
        %v421 = vld [vmem:[%s402 + $0x90] sm:$0xff]
        %v422 = vld [vmem:[%s402 + $0x98] sm:$0xff]
        %v423 = vld [vmem:[%s402 + $0xa0] sm:$0xff]
        %v424 = vld [vmem:[%s402 + $0xa8] sm:$0xff]
        %v425 = vld [vmem:[%s402 + $0xb0] sm:$0xff]
        %v426 = vld [vmem:[%s402 + $0xb8] sm:$0xff]
        %v427 = vld [vmem:[%s402 + $0xc0] sm:$0xff]
        %v428 = vld [vmem:[%s402 + $0xc8] sm:$0xff]
        %v429 = vld [vmem:[%s402 + $0xd0] sm:$0xff]
        %v430 = vld [vmem:[%s402 + $0xd8] sm:$0xff]
        %v431 = vld [vmem:[%s402 + $0xe0] sm:$0xff]
        %v432 = vld [vmem:[%s402 + $0xe8] sm:$0xff]
        %v433 = vld [vmem:[%s402 + $0xf0] sm:$0xff]
        %v434 = vld [vmem:[%s402 + $0xf8] sm:$0xff]
        %s435 = smul.u32 %s396, 32
        %s436 = smul.addr %s435, 4
        %s437 = scalar_lea.vmem [#allocation2], %s436
        %v438 = vld [vmem:[%s437] sm:$0xf]
        %v439 = vld [vmem:[%s437 + $0x4] sm:$0xf]
        %v440 = vld [vmem:[%s437 + $0x8] sm:$0xf]
        %v441 = vld [vmem:[%s437 + $0xc] sm:$0xf]
        %v442 = vld [vmem:[%s437 + $0x10] sm:$0xf]
        %v443 = vld [vmem:[%s437 + $0x14] sm:$0xf]
        %v444 = vld [vmem:[%s437 + $0x18] sm:$0xf]
        %v445 = vld [vmem:[%s437 + $0x1c] sm:$0xf]
        %v446 = vld [vmem:[%s437 + $0x20] sm:$0xf]
        %v447 = vld [vmem:[%s437 + $0x24] sm:$0xf]
        %v448 = vld [vmem:[%s437 + $0x28] sm:$0xf]
        %v449 = vld [vmem:[%s437 + $0x2c] sm:$0xf]
        %v450 = vld [vmem:[%s437 + $0x30] sm:$0xf]
        %v451 = vld [vmem:[%s437 + $0x34] sm:$0xf]
        %v452 = vld [vmem:[%s437 + $0x38] sm:$0xf]
        %v453 = vld [vmem:[%s437 + $0x3c] sm:$0xf]
        %v454 = vld [vmem:[%s437 + $0x40] sm:$0xf]
        %v455 = vld [vmem:[%s437 + $0x44] sm:$0xf]
        %v456 = vld [vmem:[%s437 + $0x48] sm:$0xf]
        %v457 = vld [vmem:[%s437 + $0x4c] sm:$0xf]
        %v458 = vld [vmem:[%s437 + $0x50] sm:$0xf]
        %v459 = vld [vmem:[%s437 + $0x54] sm:$0xf]
        %v460 = vld [vmem:[%s437 + $0x58] sm:$0xf]
        %v461 = vld [vmem:[%s437 + $0x5c] sm:$0xf]
        %v462 = vld [vmem:[%s437 + $0x60] sm:$0xf]
        %v463 = vld [vmem:[%s437 + $0x64] sm:$0xf]
        %v464 = vld [vmem:[%s437 + $0x68] sm:$0xf]
        %v465 = vld [vmem:[%s437 + $0x6c] sm:$0xf]
        %v466 = vld [vmem:[%s437 + $0x70] sm:$0xf]
        %v467 = vld [vmem:[%s437 + $0x74] sm:$0xf]
        %v468 = vld [vmem:[%s437 + $0x78] sm:$0xf]
        %v469 = vld [vmem:[%s437 + $0x7c] sm:$0xf]
        %v502 = vunpack.c.l.b16 %v403
        %v503 = vunpack.c.h.b16 %v403
        %v504 = vunpack.c.l.b16 %v404
        %v505 = vunpack.c.h.b16 %v404
        %v506 = vunpack.c.l.b16 %v405
        %v507 = vunpack.c.h.b16 %v405
        %v508 = vunpack.c.l.b16 %v406
        %v509 = vunpack.c.h.b16 %v406
        %v510 = vunpack.c.l.b16 %v407
        %v511 = vunpack.c.h.b16 %v407
        %v512 = vunpack.c.l.b16 %v408
        %v513 = vunpack.c.h.b16 %v408
        %v514 = vunpack.c.l.b16 %v409
        %v515 = vunpack.c.h.b16 %v409
        %v516 = vunpack.c.l.b16 %v410
        %v517 = vunpack.c.h.b16 %v410
        %v518 = vunpack.c.l.b16 %v411
        %v519 = vunpack.c.h.b16 %v411
        %v520 = vunpack.c.l.b16 %v412
        %v521 = vunpack.c.h.b16 %v412
        %v522 = vunpack.c.l.b16 %v413
        %v523 = vunpack.c.h.b16 %v413
        %v524 = vunpack.c.l.b16 %v414
        %v525 = vunpack.c.h.b16 %v414
        %v526 = vunpack.c.l.b16 %v415
        %v527 = vunpack.c.h.b16 %v415
        %v528 = vunpack.c.l.b16 %v416
        %v529 = vunpack.c.h.b16 %v416
        %v530 = vunpack.c.l.b16 %v417
        %v531 = vunpack.c.h.b16 %v417
        %v532 = vunpack.c.l.b16 %v418
        %v533 = vunpack.c.h.b16 %v418
        %v534 = vunpack.c.l.b16 %v419
        %v535 = vunpack.c.h.b16 %v419
        %v536 = vunpack.c.l.b16 %v420
        %v537 = vunpack.c.h.b16 %v420
        %v538 = vunpack.c.l.b16 %v421
        %v539 = vunpack.c.h.b16 %v421
        %v540 = vunpack.c.l.b16 %v422
        %v541 = vunpack.c.h.b16 %v422
        %v542 = vunpack.c.l.b16 %v423
        %v543 = vunpack.c.h.b16 %v423
        %v544 = vunpack.c.l.b16 %v424
        %v545 = vunpack.c.h.b16 %v424
        %v546 = vunpack.c.l.b16 %v425
        %v547 = vunpack.c.h.b16 %v425
        %v548 = vunpack.c.l.b16 %v426
        %v549 = vunpack.c.h.b16 %v426
        %v550 = vunpack.c.l.b16 %v427
        %v551 = vunpack.c.h.b16 %v427
        %v552 = vunpack.c.l.b16 %v428
        %v553 = vunpack.c.h.b16 %v428
        %v554 = vunpack.c.l.b16 %v429
        %v555 = vunpack.c.h.b16 %v429
        %v556 = vunpack.c.l.b16 %v430
        %v557 = vunpack.c.h.b16 %v430
        %v558 = vunpack.c.l.b16 %v431
        %v559 = vunpack.c.h.b16 %v431
        %v560 = vunpack.c.l.b16 %v432
        %v561 = vunpack.c.h.b16 %v432
        %v562 = vunpack.c.l.b16 %v433
        %v563 = vunpack.c.h.b16 %v433
        %v564 = vunpack.c.l.b16 %v434
        %v565 = vunpack.c.h.b16 %v434
        %v566 = vpack.c.b16 %v504, %v502
        %v567 = vpack.c.b16 %v505, %v503
        %v568 = vpack.c.b16 %v508, %v506
        %v569 = vpack.c.b16 %v509, %v507
        %v570 = vpack.c.b16 %v512, %v510
        %v571 = vpack.c.b16 %v513, %v511
        %v572 = vpack.c.b16 %v516, %v514
        %v573 = vpack.c.b16 %v517, %v515
        %v574 = vpack.c.b16 %v520, %v518
        %v575 = vpack.c.b16 %v521, %v519
        %v576 = vpack.c.b16 %v524, %v522
        %v577 = vpack.c.b16 %v525, %v523
        %v578 = vpack.c.b16 %v528, %v526
        %v579 = vpack.c.b16 %v529, %v527
        %v580 = vpack.c.b16 %v532, %v530
        %v581 = vpack.c.b16 %v533, %v531
        %v582 = vpack.c.b16 %v536, %v534
        %v583 = vpack.c.b16 %v537, %v535
        %v584 = vpack.c.b16 %v540, %v538
        %v585 = vpack.c.b16 %v541, %v539
        %v586 = vpack.c.b16 %v544, %v542
        %v587 = vpack.c.b16 %v545, %v543
        %v588 = vpack.c.b16 %v548, %v546
        %v589 = vpack.c.b16 %v549, %v547
        %v590 = vpack.c.b16 %v552, %v550
        %v591 = vpack.c.b16 %v553, %v551
        %v592 = vpack.c.b16 %v556, %v554
        %v593 = vpack.c.b16 %v557, %v555
        %v594 = vpack.c.b16 %v560, %v558
        %v595 = vpack.c.b16 %v561, %v559
        %v596 = vpack.c.b16 %v564, %v562
        %v597 = vpack.c.b16 %v565, %v563
        %v662 = vunpack.c.l.b16 %v438
        %v663 = vunpack.c.l.b16 %v439
        %v664 = vunpack.c.l.b16 %v440
        %v665 = vunpack.c.l.b16 %v441
        %v666 = vunpack.c.l.b16 %v442
        %v667 = vunpack.c.l.b16 %v443
        %v668 = vunpack.c.l.b16 %v444
        %v669 = vunpack.c.l.b16 %v445
        %v670 = vunpack.c.l.b16 %v446
        %v671 = vunpack.c.l.b16 %v447
        %v672 = vunpack.c.l.b16 %v448
        %v673 = vunpack.c.l.b16 %v449
        %v674 = vunpack.c.l.b16 %v450
        %v675 = vunpack.c.l.b16 %v451
        %v676 = vunpack.c.l.b16 %v452
        %v677 = vunpack.c.l.b16 %v453
        %v678 = vunpack.c.l.b16 %v454
        %v679 = vunpack.c.l.b16 %v455
        %v680 = vunpack.c.l.b16 %v456
        %v681 = vunpack.c.l.b16 %v457
        %v682 = vunpack.c.l.b16 %v458
        %v683 = vunpack.c.l.b16 %v459
        %v684 = vunpack.c.l.b16 %v460
        %v685 = vunpack.c.l.b16 %v461
        %v686 = vunpack.c.l.b16 %v462
        %v687 = vunpack.c.l.b16 %v463
        %v688 = vunpack.c.l.b16 %v464
        %v689 = vunpack.c.l.b16 %v465
        %v690 = vunpack.c.l.b16 %v466
        %v691 = vunpack.c.l.b16 %v467
        %v692 = vunpack.c.l.b16 %v468
        %v693 = vunpack.c.l.b16 %v469
        %v694 = vpack.c.b16 %v663, %v662
        %v695 = vpack.c.b16 %v665, %v664
        %v696 = vpack.c.b16 %v667, %v666
        %v697 = vpack.c.b16 %v669, %v668
        %v698 = vpack.c.b16 %v671, %v670
        %v699 = vpack.c.b16 %v673, %v672
        %v700 = vpack.c.b16 %v675, %v674
        %v701 = vpack.c.b16 %v677, %v676
        %v702 = vpack.c.b16 %v679, %v678
        %v703 = vpack.c.b16 %v681, %v680
        %v704 = vpack.c.b16 %v683, %v682
        %v705 = vpack.c.b16 %v685, %v684
        %v706 = vpack.c.b16 %v687, %v686
        %v707 = vpack.c.b16 %v689, %v688
        %v708 = vpack.c.b16 %v691, %v690
        %v709 = vpack.c.b16 %v693, %v692
        %726 = vmatprep.subr.bf16.mxu0 0
        %727 = vmatpush1.bf16.msra.mxu0 %v701
        %728 = vmatprep.subr.bf16.mxu0 0
        %729 = vmatpush1.bf16.msra.mxu0 %v700
        %730 = vmatprep.subr.bf16.mxu0 0
        %731 = vmatpush1.bf16.msra.mxu0 %v699
        %732 = vmatprep.subr.bf16.mxu0 0
        %733 = vmatpush1.bf16.msra.mxu0 %v698
        %734 = vmatprep.subr.bf16.mxu0 0
        %735 = vmatpush1.bf16.msra.mxu0 %v697
        %736 = vmatprep.subr.bf16.mxu0 0
        %737 = vmatpush1.bf16.msra.mxu0 %v696
        %738 = vmatprep.subr.bf16.mxu0 0
        %739 = vmatpush1.bf16.msra.mxu0 %v695
        %740 = vmatprep.subr.bf16.mxu0 0
        %741 = vmatpush1.bf16.msra.mxu0 %v694
        %742 = vmatprep.subr.bf16.mxu0 0
        %743 = vmatpush2.bf16.msra.mxu0 %v709
        %744 = vmatprep.subr.bf16.mxu0 0
        %745 = vmatpush2.bf16.msra.mxu0 %v708
        %746 = vmatprep.subr.bf16.mxu0 0
        %747 = vmatpush2.bf16.msra.mxu0 %v707
        %748 = vmatprep.subr.bf16.mxu0 0
        %749 = vmatpush2.bf16.msra.mxu0 %v706
        %750 = vmatprep.subr.bf16.mxu0 0
        %751 = vmatpush2.bf16.msra.mxu0 %v705
        %752 = vmatprep.subr.bf16.mxu0 0
        %753 = vmatpush2.bf16.msra.mxu0 %v704
        %754 = vmatprep.subr.bf16.mxu0 0
        %755 = vmatpush2.bf16.msra.mxu0 %v703
        %756 = vmatprep.subr.bf16.mxu0 0
        %757 = vmatpush2.bf16.msra.mxu0 %v702
        %758 = vmatprep.mubr.bf16.mxu0 %v567
        %759 = vmatmul.mubr.bf16.gmra.mxu0 %v566
        %v760 = vpop.f32.mrf.mxu0
        %v761 = vadd.f32 0.0, %v760
        %v762 = vpop.f32.mrf.mxu0
        %v763 = vpop.f32.mrf.mxu0
        %v764 = vadd.f32 0.0, %v763
        %v765 = vpop.f32.mrf.mxu0
        %766 = vmatprep.mubr.bf16.mxu0 %v569
        %767 = vmatmul.mubr.bf16.gmra.mxu0 %v568
        %v768 = vpop.f32.mrf.mxu0
        %v769 = vadd.f32 0.0, %v768
        %v770 = vpop.f32.mrf.mxu0
        %v771 = vpop.f32.mrf.mxu0
        %v772 = vadd.f32 0.0, %v771
        %v773 = vpop.f32.mrf.mxu0
        %774 = vmatprep.mubr.bf16.mxu0 %v571
        %775 = vmatmul.mubr.bf16.gmra.mxu0 %v570
        %v776 = vpop.f32.mrf.mxu0
        %v777 = vadd.f32 0.0, %v776
        %v778 = vpop.f32.mrf.mxu0
        %v779 = vpop.f32.mrf.mxu0
        %v780 = vadd.f32 0.0, %v779
        %v781 = vpop.f32.mrf.mxu0
        %782 = vmatprep.mubr.bf16.mxu0 %v573
        %783 = vmatmul.mubr.bf16.gmra.mxu0 %v572
        %v784 = vpop.f32.mrf.mxu0
        %v785 = vadd.f32 0.0, %v784
        %v786 = vpop.f32.mrf.mxu0
        %v787 = vpop.f32.mrf.mxu0
        %v788 = vadd.f32 0.0, %v787
        %v789 = vpop.f32.mrf.mxu0
        %790 = vmatprep.mubr.bf16.mxu0 %v575
        %791 = vmatmul.mubr.bf16.gmra.mxu0 %v574
        %v792 = vpop.f32.mrf.mxu0
        %v793 = vadd.f32 0.0, %v792
        %v794 = vpop.f32.mrf.mxu0
        %v795 = vpop.f32.mrf.mxu0
        %v796 = vadd.f32 0.0, %v795
        %v797 = vpop.f32.mrf.mxu0
        %798 = vmatprep.mubr.bf16.mxu0 %v577
        %799 = vmatmul.mubr.bf16.gmra.mxu0 %v576
        %v800 = vpop.f32.mrf.mxu0
        %v801 = vadd.f32 0.0, %v800
        %v802 = vpop.f32.mrf.mxu0
        %v803 = vpop.f32.mrf.mxu0
        %v804 = vadd.f32 0.0, %v803
        %v805 = vpop.f32.mrf.mxu0
        %806 = vmatprep.mubr.bf16.mxu0 %v579
        %807 = vmatmul.mubr.bf16.gmra.mxu0 %v578
        %v808 = vpop.f32.mrf.mxu0
        %v809 = vadd.f32 0.0, %v808
        %v810 = vpop.f32.mrf.mxu0
        %v811 = vpop.f32.mrf.mxu0
        %v812 = vadd.f32 0.0, %v811
        %v813 = vpop.f32.mrf.mxu0
        %814 = vmatprep.mubr.bf16.mxu0 %v581
        %815 = vmatmul.mubr.bf16.gmra.mxu0 %v580
        %v816 = vpop.f32.mrf.mxu0
        %v817 = vadd.f32 0.0, %v816
        %v818 = vpop.f32.mrf.mxu0
        %v819 = vpop.f32.mrf.mxu0
        %v820 = vadd.f32 0.0, %v819
        %v821 = vpop.f32.mrf.mxu0
        %822 = vmatprep.mubr.bf16.mxu0 %v583
        %823 = vmatmul.mubr.bf16.gmra.mxu0 %v582
        %v824 = vpop.f32.mrf.mxu0
        %v825 = vadd.f32 0.0, %v824
        %v826 = vpop.f32.mrf.mxu0
        %v827 = vpop.f32.mrf.mxu0
        %v828 = vadd.f32 0.0, %v827
        %v829 = vpop.f32.mrf.mxu0
        %830 = vmatprep.mubr.bf16.mxu0 %v585
        %831 = vmatmul.mubr.bf16.gmra.mxu0 %v584
        %v832 = vpop.f32.mrf.mxu0
        %v833 = vadd.f32 0.0, %v832
        %v834 = vpop.f32.mrf.mxu0
        %v835 = vpop.f32.mrf.mxu0
        %v836 = vadd.f32 0.0, %v835
        %v837 = vpop.f32.mrf.mxu0
        %838 = vmatprep.mubr.bf16.mxu0 %v587
        %839 = vmatmul.mubr.bf16.gmra.mxu0 %v586
        %v840 = vpop.f32.mrf.mxu0
        %v841 = vadd.f32 0.0, %v840
        %v842 = vpop.f32.mrf.mxu0
        %v843 = vpop.f32.mrf.mxu0
        %v844 = vadd.f32 0.0, %v843
        %v845 = vpop.f32.mrf.mxu0
        %846 = vmatprep.mubr.bf16.mxu0 %v589
        %847 = vmatmul.mubr.bf16.gmra.mxu0 %v588
        %v848 = vpop.f32.mrf.mxu0
        %v849 = vadd.f32 0.0, %v848
        %v850 = vpop.f32.mrf.mxu0
        %v851 = vpop.f32.mrf.mxu0
        %v852 = vadd.f32 0.0, %v851
        %v853 = vpop.f32.mrf.mxu0
        %854 = vmatprep.mubr.bf16.mxu0 %v591
        %855 = vmatmul.mubr.bf16.gmra.mxu0 %v590
        %v856 = vpop.f32.mrf.mxu0
        %v857 = vadd.f32 0.0, %v856
        %v858 = vpop.f32.mrf.mxu0
        %v859 = vpop.f32.mrf.mxu0
        %v860 = vadd.f32 0.0, %v859
        %v861 = vpop.f32.mrf.mxu0
        %862 = vmatprep.mubr.bf16.mxu0 %v593
        %863 = vmatmul.mubr.bf16.gmra.mxu0 %v592
        %v864 = vpop.f32.mrf.mxu0
        %v865 = vadd.f32 0.0, %v864
        %v866 = vpop.f32.mrf.mxu0
        %v867 = vpop.f32.mrf.mxu0
        %v868 = vadd.f32 0.0, %v867
        %v869 = vpop.f32.mrf.mxu0
        %870 = vmatprep.mubr.bf16.mxu0 %v595
        %871 = vmatmul.mubr.bf16.gmra.mxu0 %v594
        %v872 = vpop.f32.mrf.mxu0
        %v873 = vadd.f32 0.0, %v872
        %v874 = vpop.f32.mrf.mxu0
        %v875 = vpop.f32.mrf.mxu0
        %v876 = vadd.f32 0.0, %v875
        %v877 = vpop.f32.mrf.mxu0
        %878 = vmatprep.mubr.bf16.mxu0 %v597
        %879 = vmatmul.mubr.bf16.gmra.mxu0 %v596
        %v880 = vpop.f32.mrf.mxu0
        %v881 = vadd.f32 0.0, %v880
        %v882 = vpop.f32.mrf.mxu0
        %v883 = vpop.f32.mrf.mxu0
        %v884 = vadd.f32 0.0, %v883
        %v885 = vpop.f32.mrf.mxu0
        %886 = vdwg.mxu0
        %v887 = vpack.c.bf16 %v764, %v761
        %v888 = vpack.c.bf16 %v772, %v769
        %v889 = vpack.c.bf16 %v780, %v777
        %v890 = vpack.c.bf16 %v788, %v785
        %v891 = vpack.c.bf16 %v796, %v793
        %v892 = vpack.c.bf16 %v804, %v801
        %v893 = vpack.c.bf16 %v812, %v809
        %v894 = vpack.c.bf16 %v820, %v817
        %v895 = vpack.c.bf16 %v828, %v825
        %v896 = vpack.c.bf16 %v836, %v833
        %v897 = vpack.c.bf16 %v844, %v841
        %v898 = vpack.c.bf16 %v852, %v849
        %v899 = vpack.c.bf16 %v860, %v857
        %v900 = vpack.c.bf16 %v868, %v865
        %v901 = vpack.c.bf16 %v876, %v873
        %v902 = vpack.c.bf16 %v884, %v881
        %v919 = vunpack.c.l.b16 %v887
        %v920 = vunpack.c.h.b16 %v887
        %v921 = vunpack.c.l.b16 %v888
        %v922 = vunpack.c.h.b16 %v888
        %v923 = vunpack.c.l.b16 %v889
        %v924 = vunpack.c.h.b16 %v889
        %v925 = vunpack.c.l.b16 %v890
        %v926 = vunpack.c.h.b16 %v890
        %v927 = vunpack.c.l.b16 %v891
        %v928 = vunpack.c.h.b16 %v891
        %v929 = vunpack.c.l.b16 %v892
        %v930 = vunpack.c.h.b16 %v892
        %v931 = vunpack.c.l.b16 %v893
        %v932 = vunpack.c.h.b16 %v893
        %v933 = vunpack.c.l.b16 %v894
        %v934 = vunpack.c.h.b16 %v894
        %v935 = vunpack.c.l.b16 %v895
        %v936 = vunpack.c.h.b16 %v895
        %v937 = vunpack.c.l.b16 %v896
        %v938 = vunpack.c.h.b16 %v896
        %v939 = vunpack.c.l.b16 %v897
        %v940 = vunpack.c.h.b16 %v897
        %v941 = vunpack.c.l.b16 %v898
        %v942 = vunpack.c.h.b16 %v898
        %v943 = vunpack.c.l.b16 %v899
        %v944 = vunpack.c.h.b16 %v899
        %v945 = vunpack.c.l.b16 %v900
        %v946 = vunpack.c.h.b16 %v900
        %v947 = vunpack.c.l.b16 %v901
        %v948 = vunpack.c.h.b16 %v901
        %v949 = vunpack.c.l.b16 %v902
        %v950 = vunpack.c.h.b16 %v902
        %v951 = vpack.c.b16 %v919, %v919
        %v952 = vpack.c.b16 %v920, %v920
        %v953 = vpack.c.b16 %v921, %v921
        %v954 = vpack.c.b16 %v922, %v922
        %v955 = vpack.c.b16 %v923, %v923
        %v956 = vpack.c.b16 %v924, %v924
        %v957 = vpack.c.b16 %v925, %v925
        %v958 = vpack.c.b16 %v926, %v926
        %v959 = vpack.c.b16 %v927, %v927
        %v960 = vpack.c.b16 %v928, %v928
        %v961 = vpack.c.b16 %v929, %v929
        %v962 = vpack.c.b16 %v930, %v930
        %v963 = vpack.c.b16 %v931, %v931
        %v964 = vpack.c.b16 %v932, %v932
        %v965 = vpack.c.b16 %v933, %v933
        %v966 = vpack.c.b16 %v934, %v934
        %v967 = vpack.c.b16 %v935, %v935
        %v968 = vpack.c.b16 %v936, %v936
        %v969 = vpack.c.b16 %v937, %v937
        %v970 = vpack.c.b16 %v938, %v938
        %v971 = vpack.c.b16 %v939, %v939
        %v972 = vpack.c.b16 %v940, %v940
        %v973 = vpack.c.b16 %v941, %v941
        %v974 = vpack.c.b16 %v942, %v942
        %v975 = vpack.c.b16 %v943, %v943
        %v976 = vpack.c.b16 %v944, %v944
        %v977 = vpack.c.b16 %v945, %v945
        %v978 = vpack.c.b16 %v946, %v946
        %v979 = vpack.c.b16 %v947, %v947
        %v980 = vpack.c.b16 %v948, %v948
        %v981 = vpack.c.b16 %v949, %v949
        %v982 = vpack.c.b16 %v950, %v950
        %s1015 = smul.u32 %s397, 32
        %s1016 = sadd.s32 %s398, %s1015
        %s1017 = smul.addr %s1016, 4
        %s1018 = scalar_lea.vmem [#allocation2], %s1017
        %1019 = vst [vmem:[%s1018] sm:$0xf] %v951
        %1020 = vst [vmem:[%s1018 + $0x4] sm:$0xf] %v952
        %1021 = vst [vmem:[%s1018 + $0x8] sm:$0xf] %v953
        %1022 = vst [vmem:[%s1018 + $0xc] sm:$0xf] %v954
        %1023 = vst [vmem:[%s1018 + $0x10] sm:$0xf] %v955
        %1024 = vst [vmem:[%s1018 + $0x14] sm:$0xf] %v956
        %1025 = vst [vmem:[%s1018 + $0x18] sm:$0xf] %v957
        %1026 = vst [vmem:[%s1018 + $0x1c] sm:$0xf] %v958
        %1027 = vst [vmem:[%s1018 + $0x20] sm:$0xf] %v959
        %1028 = vst [vmem:[%s1018 + $0x24] sm:$0xf] %v960
        %1029 = vst [vmem:[%s1018 + $0x28] sm:$0xf] %v961
        %1030 = vst [vmem:[%s1018 + $0x2c] sm:$0xf] %v962
        %1031 = vst [vmem:[%s1018 + $0x30] sm:$0xf] %v963
        %1032 = vst [vmem:[%s1018 + $0x34] sm:$0xf] %v964
        %1033 = vst [vmem:[%s1018 + $0x38] sm:$0xf] %v965
        %1034 = vst [vmem:[%s1018 + $0x3c] sm:$0xf] %v966
        %1035 = vst [vmem:[%s1018 + $0x40] sm:$0xf] %v967
        %1036 = vst [vmem:[%s1018 + $0x44] sm:$0xf] %v968
        %1037 = vst [vmem:[%s1018 + $0x48] sm:$0xf] %v969
        %1038 = vst [vmem:[%s1018 + $0x4c] sm:$0xf] %v970
        %1039 = vst [vmem:[%s1018 + $0x50] sm:$0xf] %v971
        %1040 = vst [vmem:[%s1018 + $0x54] sm:$0xf] %v972
        %1041 = vst [vmem:[%s1018 + $0x58] sm:$0xf] %v973
        %1042 = vst [vmem:[%s1018 + $0x5c] sm:$0xf] %v974
        %1043 = vst [vmem:[%s1018 + $0x60] sm:$0xf] %v975
        %1044 = vst [vmem:[%s1018 + $0x64] sm:$0xf] %v976
        %1045 = vst [vmem:[%s1018 + $0x68] sm:$0xf] %v977
        %1046 = vst [vmem:[%s1018 + $0x6c] sm:$0xf] %v978
        %1047 = vst [vmem:[%s1018 + $0x70] sm:$0xf] %v979
        %1048 = vst [vmem:[%s1018 + $0x74] sm:$0xf] %v980
        %1049 = vst [vmem:[%s1018 + $0x78] sm:$0xf] %v981
        %1050 = vst [vmem:[%s1018 + $0x7c] sm:$0xf] %v982
        %s1051 = scalar_lea.vmem [#allocation3], %s177
        %v1052 = vld [vmem:[%s1051] sm:$0xff]
        %v1053 = vld [vmem:[%s1051 + $0x8] sm:$0xff]
        %v1054 = vld [vmem:[%s1051 + $0x10] sm:$0xff]
        %v1055 = vld [vmem:[%s1051 + $0x18] sm:$0xff]
        %v1056 = vld [vmem:[%s1051 + $0x20] sm:$0xff]
        %v1057 = vld [vmem:[%s1051 + $0x28] sm:$0xff]
        %v1058 = vld [vmem:[%s1051 + $0x30] sm:$0xff]
        %v1059 = vld [vmem:[%s1051 + $0x38] sm:$0xff]
        %v1060 = vld [vmem:[%s1051 + $0x40] sm:$0xff]
        %v1061 = vld [vmem:[%s1051 + $0x48] sm:$0xff]
        %v1062 = vld [vmem:[%s1051 + $0x50] sm:$0xff]
        %v1063 = vld [vmem:[%s1051 + $0x58] sm:$0xff]
        %v1064 = vld [vmem:[%s1051 + $0x60] sm:$0xff]
        %v1065 = vld [vmem:[%s1051 + $0x68] sm:$0xff]
        %v1066 = vld [vmem:[%s1051 + $0x70] sm:$0xff]
        %v1067 = vld [vmem:[%s1051 + $0x78] sm:$0xff]
        %v1068 = vld [vmem:[%s1051 + $0x80] sm:$0xff]
        %v1069 = vld [vmem:[%s1051 + $0x88] sm:$0xff]
        %v1070 = vld [vmem:[%s1051 + $0x90] sm:$0xff]
        %v1071 = vld [vmem:[%s1051 + $0x98] sm:$0xff]
        %v1072 = vld [vmem:[%s1051 + $0xa0] sm:$0xff]
        %v1073 = vld [vmem:[%s1051 + $0xa8] sm:$0xff]
        %v1074 = vld [vmem:[%s1051 + $0xb0] sm:$0xff]
        %v1075 = vld [vmem:[%s1051 + $0xb8] sm:$0xff]
        %v1076 = vld [vmem:[%s1051 + $0xc0] sm:$0xff]
        %v1077 = vld [vmem:[%s1051 + $0xc8] sm:$0xff]
        %v1078 = vld [vmem:[%s1051 + $0xd0] sm:$0xff]
        %v1079 = vld [vmem:[%s1051 + $0xd8] sm:$0xff]
        %v1080 = vld [vmem:[%s1051 + $0xe0] sm:$0xff]
        %v1081 = vld [vmem:[%s1051 + $0xe8] sm:$0xff]
        %v1082 = vld [vmem:[%s1051 + $0xf0] sm:$0xff]
        %v1083 = vld [vmem:[%s1051 + $0xf8] sm:$0xff]
        %s1084 = sadd.s32 %s27, 1
        %s1085 = sld [smem:[#allocation5 + %s1084]]
        %v1086 = vstv %s1085
        %v1087 = vmul.f32 %v1086, %v761
        %v1088 = vmul.f32 %v1086, %v764
        %v1089 = vmul.f32 %v1086, %v769
        %v1090 = vmul.f32 %v1086, %v772
        %v1091 = vmul.f32 %v1086, %v777
        %v1092 = vmul.f32 %v1086, %v780
        %v1093 = vmul.f32 %v1086, %v785
        %v1094 = vmul.f32 %v1086, %v788
        %v1095 = vmul.f32 %v1086, %v793
        %v1096 = vmul.f32 %v1086, %v796
        %v1097 = vmul.f32 %v1086, %v801
        %v1098 = vmul.f32 %v1086, %v804
        %v1099 = vmul.f32 %v1086, %v809
        %v1100 = vmul.f32 %v1086, %v812
        %v1101 = vmul.f32 %v1086, %v817
        %v1102 = vmul.f32 %v1086, %v820
        %v1103 = vmul.f32 %v1086, %v825
        %v1104 = vmul.f32 %v1086, %v828
        %v1105 = vmul.f32 %v1086, %v833
        %v1106 = vmul.f32 %v1086, %v836
        %v1107 = vmul.f32 %v1086, %v841
        %v1108 = vmul.f32 %v1086, %v844
        %v1109 = vmul.f32 %v1086, %v849
        %v1110 = vmul.f32 %v1086, %v852
        %v1111 = vmul.f32 %v1086, %v857
        %v1112 = vmul.f32 %v1086, %v860
        %v1113 = vmul.f32 %v1086, %v865
        %v1114 = vmul.f32 %v1086, %v868
        %v1115 = vmul.f32 %v1086, %v873
        %v1116 = vmul.f32 %v1086, %v876
        %v1117 = vmul.f32 %v1086, %v881
        %v1118 = vmul.f32 %v1086, %v884
        %v1119 = vadd.f32 %v1052, %v1087
        %v1120 = vadd.f32 %v1053, %v1088
        %v1121 = vadd.f32 %v1054, %v1089
        %v1122 = vadd.f32 %v1055, %v1090
        %v1123 = vadd.f32 %v1056, %v1091
        %v1124 = vadd.f32 %v1057, %v1092
        %v1125 = vadd.f32 %v1058, %v1093
        %v1126 = vadd.f32 %v1059, %v1094
        %v1127 = vadd.f32 %v1060, %v1095
        %v1128 = vadd.f32 %v1061, %v1096
        %v1129 = vadd.f32 %v1062, %v1097
        %v1130 = vadd.f32 %v1063, %v1098
        %v1131 = vadd.f32 %v1064, %v1099
        %v1132 = vadd.f32 %v1065, %v1100
        %v1133 = vadd.f32 %v1066, %v1101
        %v1134 = vadd.f32 %v1067, %v1102
        %v1135 = vadd.f32 %v1068, %v1103
        %v1136 = vadd.f32 %v1069, %v1104
        %v1137 = vadd.f32 %v1070, %v1105
        %v1138 = vadd.f32 %v1071, %v1106
        %v1139 = vadd.f32 %v1072, %v1107
        %v1140 = vadd.f32 %v1073, %v1108
        %v1141 = vadd.f32 %v1074, %v1109
        %v1142 = vadd.f32 %v1075, %v1110
        %v1143 = vadd.f32 %v1076, %v1111
        %v1144 = vadd.f32 %v1077, %v1112
        %v1145 = vadd.f32 %v1078, %v1113
        %v1146 = vadd.f32 %v1079, %v1114
        %v1147 = vadd.f32 %v1080, %v1115
        %v1148 = vadd.f32 %v1081, %v1116
        %v1149 = vadd.f32 %v1082, %v1117
        %v1150 = vadd.f32 %v1083, %v1118
        %1151 = vst [vmem:[%s1051] sm:$0xff] %v1119
        %1152 = vst [vmem:[%s1051 + $0x8] sm:$0xff] %v1120
        %1153 = vst [vmem:[%s1051 + $0x10] sm:$0xff] %v1121
        %1154 = vst [vmem:[%s1051 + $0x18] sm:$0xff] %v1122
        %1155 = vst [vmem:[%s1051 + $0x20] sm:$0xff] %v1123
        %1156 = vst [vmem:[%s1051 + $0x28] sm:$0xff] %v1124
        %1157 = vst [vmem:[%s1051 + $0x30] sm:$0xff] %v1125
        %1158 = vst [vmem:[%s1051 + $0x38] sm:$0xff] %v1126
        %1159 = vst [vmem:[%s1051 + $0x40] sm:$0xff] %v1127
        %1160 = vst [vmem:[%s1051 + $0x48] sm:$0xff] %v1128
        %1161 = vst [vmem:[%s1051 + $0x50] sm:$0xff] %v1129
        %1162 = vst [vmem:[%s1051 + $0x58] sm:$0xff] %v1130
        %1163 = vst [vmem:[%s1051 + $0x60] sm:$0xff] %v1131
        %1164 = vst [vmem:[%s1051 + $0x68] sm:$0xff] %v1132
        %1165 = vst [vmem:[%s1051 + $0x70] sm:$0xff] %v1133
        %1166 = vst [vmem:[%s1051 + $0x78] sm:$0xff] %v1134
        %1167 = vst [vmem:[%s1051 + $0x80] sm:$0xff] %v1135
        %1168 = vst [vmem:[%s1051 + $0x88] sm:$0xff] %v1136
        %1169 = vst [vmem:[%s1051 + $0x90] sm:$0xff] %v1137
        %1170 = vst [vmem:[%s1051 + $0x98] sm:$0xff] %v1138
        %1171 = vst [vmem:[%s1051 + $0xa0] sm:$0xff] %v1139
        %1172 = vst [vmem:[%s1051 + $0xa8] sm:$0xff] %v1140
        %1173 = vst [vmem:[%s1051 + $0xb0] sm:$0xff] %v1141
        %1174 = vst [vmem:[%s1051 + $0xb8] sm:$0xff] %v1142
        %1175 = vst [vmem:[%s1051 + $0xc0] sm:$0xff] %v1143
        %1176 = vst [vmem:[%s1051 + $0xc8] sm:$0xff] %v1144
        %1177 = vst [vmem:[%s1051 + $0xd0] sm:$0xff] %v1145
        %1178 = vst [vmem:[%s1051 + $0xd8] sm:$0xff] %v1146
        %1179 = vst [vmem:[%s1051 + $0xe0] sm:$0xff] %v1147
        %1180 = vst [vmem:[%s1051 + $0xe8] sm:$0xff] %v1148
        %1181 = vst [vmem:[%s1051 + $0xf0] sm:$0xff] %v1149
        %1182 = vst [vmem:[%s1051 + $0xf8] sm:$0xff] %v1150
        %p1183 = scmp.eq.s32.totalorder %s27, 9
        // Predicated region
        $region45: #{tpu_custom_call.1} parent=27 // pred_check
          %p1184 = pneg %p1183
        $region46: #{tpu_custom_call.1} parent=27 // pred_check_branch
          %1186 = sbr.rel (%p1184) target = $region48
        $region47: #{tpu_custom_call.1} parent=27 // pred_region
          %1187 = vst [vmem:[%s172] sm:$0xff] %v1119
          %1188 = vst [vmem:[%s172 + $0x8] sm:$0xff] %v1120
          %1189 = vst [vmem:[%s172 + $0x10] sm:$0xff] %v1121
          %1190 = vst [vmem:[%s172 + $0x18] sm:$0xff] %v1122
          %1191 = vst [vmem:[%s172 + $0x20] sm:$0xff] %v1123
          %1192 = vst [vmem:[%s172 + $0x28] sm:$0xff] %v1124
          %1193 = vst [vmem:[%s172 + $0x30] sm:$0xff] %v1125
          %1194 = vst [vmem:[%s172 + $0x38] sm:$0xff] %v1126
          %1195 = vst [vmem:[%s172 + $0x40] sm:$0xff] %v1127
          %1196 = vst [vmem:[%s172 + $0x48] sm:$0xff] %v1128
          %1197 = vst [vmem:[%s172 + $0x50] sm:$0xff] %v1129
          %1198 = vst [vmem:[%s172 + $0x58] sm:$0xff] %v1130
          %1199 = vst [vmem:[%s172 + $0x60] sm:$0xff] %v1131
          %1200 = vst [vmem:[%s172 + $0x68] sm:$0xff] %v1132
          %1201 = vst [vmem:[%s172 + $0x70] sm:$0xff] %v1133
          %1202 = vst [vmem:[%s172 + $0x78] sm:$0xff] %v1134
          %1203 = vst [vmem:[%s172 + $0x80] sm:$0xff] %v1135
          %1204 = vst [vmem:[%s172 + $0x88] sm:$0xff] %v1136
          %1205 = vst [vmem:[%s172 + $0x90] sm:$0xff] %v1137
          %1206 = vst [vmem:[%s172 + $0x98] sm:$0xff] %v1138
          %1207 = vst [vmem:[%s172 + $0xa0] sm:$0xff] %v1139
          %1208 = vst [vmem:[%s172 + $0xa8] sm:$0xff] %v1140
          %1209 = vst [vmem:[%s172 + $0xb0] sm:$0xff] %v1141
          %1210 = vst [vmem:[%s172 + $0xb8] sm:$0xff] %v1142
          %1211 = vst [vmem:[%s172 + $0xc0] sm:$0xff] %v1143
          %1212 = vst [vmem:[%s172 + $0xc8] sm:$0xff] %v1144
          %1213 = vst [vmem:[%s172 + $0xd0] sm:$0xff] %v1145
          %1214 = vst [vmem:[%s172 + $0xd8] sm:$0xff] %v1146
          %1215 = vst [vmem:[%s172 + $0xe0] sm:$0xff] %v1147
          %1216 = vst [vmem:[%s172 + $0xe8] sm:$0xff] %v1148
          %1217 = vst [vmem:[%s172 + $0xf0] sm:$0xff] %v1149
          %1218 = vst [vmem:[%s172 + $0xf8] sm:$0xff] %v1150
        $region48: #{tpu_custom_call.1} parent=27 // pred_fallthru
          _
        %s1219 = sand.u32 %s89, 1
        %s1220 = scalar_lea.sflag [#allocation8], %s1219
        %s1221 = sand.u32 %s89, 1
        %s1222 = smul.addr %s1221, 256
        %s1223 = scalar_lea.vmem [#allocation11], %s1222
        // Predicated region
        $region49: #{tpu_custom_call.1} parent=27 // pred_check
          %p1224 = pneg %p99
        $region50: #{tpu_custom_call.1} parent=27 // pred_check_branch
          %1226 = sbr.rel (%p1224) target = $region52
        $region51: #{tpu_custom_call.1} parent=27 // pred_region
          %p1227 = scmp.eq.s32.totalorder %s27, 9
          %s1228 = scalar_select %p1227, %s28, 0
          %s1229 = smul.u32 32, %s1228
          %s1231 = ssub.s32 4096, 4096
          %1232 = vsyncadd %s1220, %s1231
          %s1233 = smul.addr %s1229, 128
          %s1234 = scalar_lea.hbm %s3, %s1233
          %s1235 = sshll.u32 %s1223, 4
          %s1236 = int_to_ptr.vmem [resolvable:$true] %s1235
          %1241 = dma.vmem_to_hbm [thread:$0]  %s1236, 4096, %s1234, %s1220, 128, 128, 8
        $region52: #{tpu_custom_call.1} parent=27 // pred_fallthru
          _
      $region28: #{tpu_custom_call.1} parent=5 // pred_fallthru
        _
      %p1242 = scmp.le.s32.totalorder 2, %s18
      // Predicated region
      $region53: #{tpu_custom_call.1} parent=5 // pred_check
        %p1243 = pneg %p1242
      $region54: #{tpu_custom_call.1} parent=5 // pred_check_branch
        %1245 = sbr.rel (%p1243) target = $region56
      $region55: #{tpu_custom_call.1} parent=5 // pred_region
        %s1246 = ssub.s32 %s18, 2
        // Predicated region
        $region57: #{tpu_custom_call.1} parent=55 // pred_check
          %p1247 = pneg %p105
        $region58: #{tpu_custom_call.1} parent=55 // pred_check_branch
          %1249 = sbr.rel (%p1247) target = $region60
        $region59: #{tpu_custom_call.1} parent=55 // pred_region
          %s1250 = sand.u32 %s90, 1
          %s1251 = scalar_lea.sflag [#allocation8], %s1250
          %s1252 = sand.u32 %s90, 1
          %s1253 = smul.addr %s1252, 256
          %s1254 = scalar_lea.vmem [#allocation11], %s1253
          %1255 = dma.done %s1251, 4096
        $region60: #{tpu_custom_call.1} parent=55 // pred_fallthru
          _
      $region56: #{tpu_custom_call.1} parent=5 // pred_fallthru
        _
    $region6: #{tpu_custom_call.1} parent=1 // loop_footer
      %s22 = sadd.s32 1, %s18
    $region7: #{tpu_custom_call.1} parent=1 // loop_footer_branch
      %17 = sbr.rel target = $region3
    $region8: #{tpu_custom_call.1} parent=1 // loop_exit
      _
    %1256 = vsyncpa [#allocation7], 1
    %s1257 = scalar_lea.sflag [#allocation7], 1
    %1258 = vsyncpa %s1257, 1
    %1259 = vsyncpa [#allocation10], 1
    %1260 = vsyncpa [#allocation8], 1
    %s1261 = scalar_lea.sflag [#allocation8], 1
    %1262 = vsyncpa %s1261, 1

</llo_original>
